<compile_context>
chip_gen: v7x
topology: tpu7x:2x2x1
jax: 0.10.0
libtpu: 0.0.40
codegen_flags: <defaults>
</compile_context>

<pallas_src>
import functools

import jax
import jax.numpy as jnp
from jax.experimental import pallas as pl
from jax.experimental.pallas import tpu as pltpu


def _round_up(x, m):
    return (x + m - 1) // m * m


def _cdiv(a, b):
    return (a + b - 1) // b


def _choose_tiles(n_dst, n_src, tm_max=1024, tk_max=2048):
    """Pick (tm, tk): tm multiple of 32 (int8 sublane tile), tk multiple of 128."""
    tm = min(tm_max, _round_up(n_dst, 32))
    # v7x has 2 TensorCores: keep the "parallel" dst axis at >= 2 tiles
    # whenever the graph is big enough to split.
    if n_dst > 32 and _cdiv(n_dst, tm) < 2:
        tm = max(32, _round_up(_cdiv(n_dst, 2), 32))
    tk = min(tk_max, _round_up(n_src, 128))
    return tm, tk


def prepare_adjacency(adj, *, tm_max=1024, tk_max=2048):
    """One-time O(N^2) pad + int8 quantization of the dense 0/1 adjacency.

    Deliberately outside the per-call hot path: cache the result and reuse it
    across layers / forward calls (the kernel's whole cost is this stream)."""
    n_dst, n_src = adj.shape
    tm, tk = _choose_tiles(n_dst, n_src, tm_max, tk_max)
    n_dst_pad = _round_up(n_dst, tm)
    n_src_pad = _round_up(n_src, tk)
    adj_p = jnp.zeros((n_dst_pad, n_src_pad), jnp.int8)
    adj_p = adj_p.at[:n_dst, :n_src].set(adj.astype(jnp.int8))
    return adj_p, (n_dst, n_src, tm, tk)


def sage_conv_kernel(adj_ref, src_ref, dst_ref, ws_ref, wn_ref, b_ref,
                     out_ref, acc_ref, *, deg_col):
    k = pl.program_id(1)

    @pl.when(k == 0)
    def _():
        acc_ref[...] = jnp.zeros_like(acc_ref)

    # --- aggregation: int8 0/1 adjacency widened to bf16 on the VPU, one MXU
    # matmul per (dst-tile, src-tile) pair, f32 accumulation.  feat_src carries
    # an all-ones column at lane `deg_col`, so the in-degree accumulates free.
    adj = adj_ref[...].astype(src_ref.dtype)
    acc_ref[...] += jnp.dot(adj, src_ref[...],
                            preferred_element_type=jnp.float32)

    @pl.when(k == pl.num_programs(1) - 1)
    def _():
        agg = acc_ref[...]                               # (tm, d_in_pad) f32
        deg = agg[:, deg_col:deg_col + 1]                # static 1-lane slice
        inv_deg = jnp.where(
            deg > 0.0,
            pl.reciprocal(jnp.maximum(deg, 1.0), approx=True),
            0.0)
        h_neigh = (agg * inv_deg).astype(src_ref.dtype)  # mean aggregation

        # Fused projection: two MXU dots (no (tm, 2*d_in_pad) concat temp),
        # f32 accumulation, pre-summed bias, ReLU (act_flag=True).
        rst = jnp.dot(dst_ref[...], ws_ref[...],
                      preferred_element_type=jnp.float32)
        rst = rst + jnp.dot(h_neigh, wn_ref[...],
                            preferred_element_type=jnp.float32)
        rst = rst + b_ref[...]
        out_ref[...] = jnp.maximum(rst, 0.0).astype(out_ref.dtype)


def _build_sage_call(n_dst_pad, n_src_pad, d_in_pad, d_out_pad, tm, tk,
                     deg_col, vmem_limit, single_buffer_weights):
    const_kwargs = {}
    if single_buffer_weights:
        # Grid-invariant operands never need a second pipeline buffer
        # (saves VMEM — matters on v7x's 64 MiB).
        const_kwargs = dict(pipeline_mode=pl.Buffered(1))

    grid = (n_dst_pad // tm, n_src_pad // tk)
    kernel = functools.partial(sage_conv_kernel, deg_col=deg_col)
    return pl.pallas_call(
        kernel,
        out_shape=jax.ShapeDtypeStruct((n_dst_pad, d_out_pad), jnp.float32),
        grid_spec=pltpu.PrefetchScalarGridSpec(
            num_scalar_prefetch=0,
            grid=grid,
            in_specs=[
                pl.BlockSpec((tm, tk), lambda i, k: (i, k)),            # adj (int8)
                pl.BlockSpec((tk, d_in_pad), lambda i, k: (k, 0)),      # feat_src (+ones)
                pl.BlockSpec((tm, d_in_pad), lambda i, k: (i, 0)),      # feat_dst
                pl.BlockSpec((d_in_pad, d_out_pad), lambda i, k: (0, 0),
                             **const_kwargs),                           # W_self
                pl.BlockSpec((d_in_pad, d_out_pad), lambda i, k: (0, 0),
                             **const_kwargs),                           # W_neigh
                pl.BlockSpec((1, d_out_pad), lambda i, k: (0, 0),
                             **const_kwargs),                           # bias (pre-summed)
            ],
            out_specs=pl.BlockSpec((tm, d_out_pad), lambda i, k: (i, 0)),
            scratch_shapes=[pltpu.VMEM((tm, d_in_pad), jnp.float32)],   # agg + deg acc
        ),
        compiler_params=pltpu.CompilerParams(
            dimension_semantics=("parallel", "arbitrary"),
            vmem_limit_bytes=vmem_limit),
    )


def sage_conv(adj_p, adj_meta, feat_src, feat_dst, w_self, b_self, w_neigh,
              b_neigh, *, compute_dtype=jnp.bfloat16):
    """adj_p/adj_meta from prepare_adjacency; weights (D_in, D_out); biases (1, D_out)."""
    n_dst, n_src, tm, tk = adj_meta
    n_dst_pad, n_src_pad = adj_p.shape
    d_in = feat_src.shape[1]
    d_out = w_self.shape[1]
    f32 = jnp.float32

    # Lane-dense padded dims; one extra src column holds the all-ones vector
    # so the aggregation matmul also yields the in-degree.
    d_in_pad = _round_up(d_in + 1, 128)
    d_out_pad = _round_up(d_out, 128)

    # --- per-call (small, O(N*D)) padding / packing of features & weights.
    src_p = jnp.zeros((n_src_pad, d_in_pad), compute_dtype)
    src_p = src_p.at[:n_src, :d_in].set(feat_src.astype(compute_dtype))
    src_p = src_p.at[:n_src, d_in].set(1)                 # ones column -> degree

    dst_p = jnp.zeros((n_dst_pad, d_in_pad), compute_dtype)
    dst_p = dst_p.at[:n_dst, :d_in].set(feat_dst.astype(compute_dtype))

    ws_p = jnp.zeros((d_in_pad, d_out_pad), compute_dtype)
    ws_p = ws_p.at[:d_in, :d_out].set(w_self.astype(compute_dtype))
    wn_p = jnp.zeros((d_in_pad, d_out_pad), compute_dtype)
    wn_p = wn_p.at[:d_in, :d_out].set(w_neigh.astype(compute_dtype))

    b_sum = jnp.zeros((1, d_out_pad), f32)
    b_sum = b_sum.at[:, :d_out].set(
        (b_self + b_neigh).reshape(1, -1).astype(f32))

    # VMEM budget derived from the actual tile footprint (double buffers for
    # streamed operands, single for weights/bias), capped at 64 MiB (v7x).
    est = (2 * tm * tk * 1                      # adj tile, int8, 2 buffers
           + 2 * tk * d_in_pad * 2              # feat_src tile, bf16
           + 2 * tm * d_in_pad * 2              # feat_dst tile, bf16
           + 2 * d_in_pad * d_out_pad * 2       # W_self + W_neigh (1 buf each)
           + d_out_pad * 4                      # bias
           + 2 * tm * d_out_pad * 4             # out tile, f32
           + tm * d_in_pad * 4)                 # accumulator scratch
    vmem_limit = int(min(max(est * 3 // 2, 32 * 1024 * 1024),
                         64 * 1024 * 1024))

    args = (adj_p, src_p, dst_p, ws_p, wn_p, b_sum)
    try:
        call = _build_sage_call(n_dst_pad, n_src_pad, d_in_pad, d_out_pad,
                                tm, tk, d_in, vmem_limit,
                                single_buffer_weights=True)
        out = call(*args)
    except Exception:
        # pipeline_mode=Buffered(1) unsupported on this JAX -> default 2-buf.
        call = _build_sage_call(n_dst_pad, n_src_pad, d_in_pad, d_out_pad,
                                tm, tk, d_in, vmem_limit,
                                single_buffer_weights=False)
        out = call(*args)

    # TODO(synk): emit bf16 output (and skip the slice) if the consumer accepts it.
    return out[:n_dst, :d_out]


if __name__ == "__main__":
    key = jax.random.PRNGKey(0)
    k_adj, k_feat, k_ws, k_bs, k_wn, k_bn = jax.random.split(key, 6)

    # Small graph: N_src = N_dst = 96 nodes, D_in = 32, D_out = 48
    # (96 dst rows -> two dst tiles, exercising the megacore-friendly split).
    n_src, n_dst, d_in, d_out = 96, 96, 32, 48

    # Random directed graph as dense adjacency (dst x src).
    adj = (jax.random.uniform(k_adj, (n_dst, n_src)) < 0.25).astype(jnp.float32)

    feat_src = jax.random.normal(k_feat, (n_src, d_in), dtype=jnp.float32)
    # include=True path: feat_dst = feat_src[:number_of_dst_nodes()]
    feat_dst = feat_src[:n_dst]

    # nn.Linear weights stored transposed as (D_in, D_out) for x @ W.
    w_self = jax.random.normal(k_ws, (d_in, d_out), dtype=jnp.float32) * 0.1
    b_self = jax.random.normal(k_bs, (1, d_out), dtype=jnp.float32) * 0.1
    w_neigh = jax.random.normal(k_wn, (d_in, d_out), dtype=jnp.float32) * 0.1
    b_neigh = jax.random.normal(k_bn, (1, d_out), dtype=jnp.float32) * 0.1

    adj_p, adj_meta = prepare_adjacency(adj)        # one-time, cacheable
    out = sage_conv(adj_p, adj_meta, feat_src, feat_dst,
                    w_self, b_self, w_neigh, b_neigh)
    out = jax.block_until_ready(out)

    # Pure-JAX f32 reference (kernel computes in bf16 with f32 accumulation and
    # an approx reciprocal -> loosened tolerance).
    deg = adj.sum(-1, keepdims=True)
    h_neigh_ref = jnp.where(deg > 0, (adj @ feat_src) / jnp.maximum(deg, 1.0), 0.0)
    ref = jnp.maximum(feat_dst @ w_self + b_self + h_neigh_ref @ w_neigh + b_neigh, 0.0)
    assert out.shape == ref.shape
    assert jnp.allclose(out, ref, atol=5e-2, rtol=5e-2), "mismatch vs reference"

    # TODO(synk): feat_drop (Dropout) and norm are identity at inference / None here.
    print("KERNEL_OK")
</pallas_src>

<mosaic_0001>
module attributes {stable_mosaic.version = 11 : i64} {
  func.func @sage_conv_kernel(%arg0: i32, %arg1: i32, %arg2: memref<64x128xi8, #tpu.memory_space<vmem>>, %arg3: memref<128x128xbf16, #tpu.memory_space<vmem>>, %arg4: memref<64x128xbf16, #tpu.memory_space<vmem>>, %arg5: memref<128x128xbf16, #tpu.memory_space<vmem>>, %arg6: memref<128x128xbf16, #tpu.memory_space<vmem>>, %arg7: memref<1x128xf32, #tpu.memory_space<vmem>>, %arg8: memref<64x128xf32, #tpu.memory_space<vmem>>, %arg9: memref<64x128xf32, #tpu.memory_space<vmem>>) attributes {dimension_semantics = [#tpu.dimension_semantics<parallel>, #tpu.dimension_semantics<arbitrary>], iteration_bounds = array<i64: 2, 1>, scalar_prefetch = 0 : i64, scratch_operands = 1 : i64, tpu.core_type = #tpu.core_type<tc>, window_params = [{transform_indices = @transform_0, window_bounds = array<i64: 64, 128>}, {transform_indices = @transform_1, window_bounds = array<i64: 128, 128>}, {transform_indices = @transform_2, window_bounds = array<i64: 64, 128>}, {pipeline_mode = #tpu.pipeline_mode<synchronous>, transform_indices = @transform_3, window_bounds = array<i64: 128, 128>}, {pipeline_mode = #tpu.pipeline_mode<synchronous>, transform_indices = @transform_4, window_bounds = array<i64: 128, 128>}, {pipeline_mode = #tpu.pipeline_mode<synchronous>, transform_indices = @transform_5, window_bounds = array<i64: 1, 128>}, {transform_indices = @transform_6, window_bounds = array<i64: 64, 128>}]} {
    %c0_i32 = arith.constant 0 : i32
    %0 = arith.cmpi eq, %arg1, %c0_i32 : i32
    %1 = arith.extui %0 : i1 to i32
    %c0_i32_0 = arith.constant 0 : i32
    %2 = arith.cmpi ne, %1, %c0_i32_0 : i32
    scf.if %2 {
      %cst_10 = arith.constant 0.000000e+00 : f32
      %13 = vector.broadcast %cst_10 : f32 to vector<64x128xf32>
      %c0_11 = arith.constant 0 : index
      %c0_12 = arith.constant 0 : index
      %14 = vector.load %arg9[%c0_11, %c0_12] : memref<64x128xf32, #tpu.memory_space<vmem>>, vector<64x128xf32>
      tpu.vector_store %arg9[%c0_11, %c0_12], %13 {strides = array<i32>} : memref<64x128xf32, #tpu.memory_space<vmem>>, vector<64x128xf32>,
    } else {
    }
    %c0 = arith.constant 0 : index
    %c0_1 = arith.constant 0 : index
    %3 = vector.load %arg2[%c0, %c0_1] : memref<64x128xi8, #tpu.memory_space<vmem>>, vector<64x128xi8>
    %4 = arith.sitofp %3 : vector<64x128xi8> to vector<64x128xbf16>
    %c0_2 = arith.constant 0 : index
    %c0_3 = arith.constant 0 : index
    %5 = vector.load %arg9[%c0_2, %c0_3] : memref<64x128xf32, #tpu.memory_space<vmem>>, vector<64x128xf32>
    %c0_4 = arith.constant 0 : index
    %c0_5 = arith.constant 0 : index
    %6 = vector.load %arg3[%c0_4, %c0_5] : memref<128x128xbf16, #tpu.memory_space<vmem>>, vector<128x128xbf16>
    %cst = arith.constant dense<0.000000e+00> : vector<64x128xf32>
    %7 = tpu.matmul %4, %6, %cst {dimension_numbers = #tpu.dot_dimension_numbers<[1], [0], [0], [1], [0, 0, 1, 1], [], []>} : vector<64x128xbf16>, vector<128x128xbf16>, vector<64x128xf32> -> vector<64x128xf32>
    %8 = arith.addf %5, %7 : vector<64x128xf32>
    %c0_6 = arith.constant 0 : index
    %c0_7 = arith.constant 0 : index
    %9 = vector.load %arg9[%c0_6, %c0_7] : memref<64x128xf32, #tpu.memory_space<vmem>>, vector<64x128xf32>
    tpu.vector_store %arg9[%c0_6, %c0_7], %8 {strides = array<i32>} : memref<64x128xf32, #tpu.memory_space<vmem>>, vector<64x128xf32>,
    %c0_i32_8 = arith.constant 0 : i32
    %10 = arith.cmpi eq, %arg1, %c0_i32_8 : i32
    %11 = arith.extui %10 : i1 to i32
    %c0_i32_9 = arith.constant 0 : i32
    %12 = arith.cmpi ne, %11, %c0_i32_9 : i32
    scf.if %12 {
      %c0_10 = arith.constant 0 : index
      %c0_11 = arith.constant 0 : index
      %13 = vector.load %arg9[%c0_10, %c0_11] : memref<64x128xf32, #tpu.memory_space<vmem>>, vector<64x128xf32>
      %14 = vector.extract_strided_slice %13 {offsets = [0, 32], sizes = [64, 1], strides = [1, 1]} : vector<64x128xf32> to vector<64x1xf32>
      %cst_12 = arith.constant 0.000000e+00 : f32
      %15 = vector.broadcast %cst_12 : f32 to vector<64x1xf32>
      %16 = arith.cmpf ogt, %14, %15 : vector<64x1xf32>
      %cst_13 = arith.constant 1.000000e+00 : f32
      %17 = vector.broadcast %cst_13 : f32 to vector<64x1xf32>
      %18 = arith.maximumf %14, %17 : vector<64x1xf32>
      %19 = tpu.reciprocal %18 {approx = true} : vector<64x1xf32> -> vector<64x1xf32>
      %cst_14 = arith.constant 0.000000e+00 : f32
      %20 = vector.broadcast %cst_14 : f32 to vector<64x1xf32>
      %21 = arith.select %16, %19, %20 : vector<64x1xi1>, vector<64x1xf32>
      %22 = vector.broadcast %21 : vector<64x1xf32> to vector<64x128xf32>
      %23 = arith.mulf %13, %22 : vector<64x128xf32>
      %24 = arith.truncf %23 : vector<64x128xf32> to vector<64x128xbf16>
      %c0_15 = arith.constant 0 : index
      %c0_16 = arith.constant 0 : index
      %25 = vector.load %arg4[%c0_15, %c0_16] : memref<64x128xbf16, #tpu.memory_space<vmem>>, vector<64x128xbf16>
      %c0_17 = arith.constant 0 : index
      %c0_18 = arith.constant 0 : index
      %26 = vector.load %arg5[%c0_17, %c0_18] : memref<128x128xbf16, #tpu.memory_space<vmem>>, vector<128x128xbf16>
      %cst_19 = arith.constant dense<0.000000e+00> : vector<64x128xf32>
      %27 = tpu.matmul %25, %26, %cst_19 {dimension_numbers = #tpu.dot_dimension_numbers<[1], [0], [0], [1], [0, 0, 1, 1], [], []>} : vector<64x128xbf16>, vector<128x128xbf16>, vector<64x128xf32> -> vector<64x128xf32>
      %c0_20 = arith.constant 0 : index
      %c0_21 = arith.constant 0 : index
      %28 = vector.load %arg6[%c0_20, %c0_21] : memref<128x128xbf16, #tpu.memory_space<vmem>>, vector<128x128xbf16>
      %cst_22 = arith.constant dense<0.000000e+00> : vector<64x128xf32>
      %29 = tpu.matmul %24, %28, %cst_22 {dimension_numbers = #tpu.dot_dimension_numbers<[1], [0], [0], [1], [0, 0, 1, 1], [], []>} : vector<64x128xbf16>, vector<128x128xbf16>, vector<64x128xf32> -> vector<64x128xf32>
      %30 = arith.addf %27, %29 : vector<64x128xf32>
      %c0_23 = arith.constant 0 : index
      %c0_24 = arith.constant 0 : index
      %31 = vector.load %arg7[%c0_23, %c0_24] : memref<1x128xf32, #tpu.memory_space<vmem>>, vector<1x128xf32>
      %32 = vector.broadcast %31 : vector<1x128xf32> to vector<64x128xf32>
      %33 = arith.addf %30, %32 : vector<64x128xf32>
      %cst_25 = arith.constant 0.000000e+00 : f32
      %34 = vector.broadcast %cst_25 : f32 to vector<64x128xf32>
      %35 = arith.maximumf %33, %34 : vector<64x128xf32>
      %c0_26 = arith.constant 0 : index
      %c0_27 = arith.constant 0 : index
      %36 = vector.load %arg8[%c0_26, %c0_27] : memref<64x128xf32, #tpu.memory_space<vmem>>, vector<64x128xf32>
      tpu.vector_store %arg8[%c0_26, %c0_27], %35 {strides = array<i32>} : memref<64x128xf32, #tpu.memory_space<vmem>>, vector<64x128xf32>,
    } else {
    }
    return
  }
  func.func @transform_0(%arg0: i32, %arg1: i32) -> (i32, i32) {
    %c0_i32 = arith.constant 0 : i32
    return %arg0, %arg1 : i32, i32
  }
  func.func @transform_1(%arg0: i32, %arg1: i32) -> (i32, i32) {
    %c0_i32 = arith.constant 0 : i32
    %c0_i32_0 = arith.constant 0 : i32
    return %arg1, %c0_i32 : i32, i32
  }
  func.func @transform_2(%arg0: i32, %arg1: i32) -> (i32, i32) {
    %c0_i32 = arith.constant 0 : i32
    %c0_i32_0 = arith.constant 0 : i32
    return %arg0, %c0_i32 : i32, i32
  }
  func.func @transform_3(%arg0: i32, %arg1: i32) -> (i32, i32) {
    %c0_i32 = arith.constant 0 : i32
    %c0_i32_0 = arith.constant 0 : i32
    %c0_i32_1 = arith.constant 0 : i32
    return %c0_i32, %c0_i32_0 : i32, i32
  }
  func.func @transform_4(%arg0: i32, %arg1: i32) -> (i32, i32) {
    %c0_i32 = arith.constant 0 : i32
    %c0_i32_0 = arith.constant 0 : i32
    %c0_i32_1 = arith.constant 0 : i32
    return %c0_i32, %c0_i32_0 : i32, i32
  }
  func.func @transform_5(%arg0: i32, %arg1: i32) -> (i32, i32) {
    %c0_i32 = arith.constant 0 : i32
    %c0_i32_0 = arith.constant 0 : i32
    %c0_i32_1 = arith.constant 0 : i32
    return %c0_i32, %c0_i32_0 : i32, i32
  }
  func.func @transform_6(%arg0: i32, %arg1: i32) -> (i32, i32) {
    %c0_i32 = arith.constant 0 : i32
    %c0_i32_0 = arith.constant 0 : i32
    return %arg0, %c0_i32 : i32, i32
  }
}

module attributes {stable_mosaic.version = 11 : i64} {
  func.func @sage_conv_kernel(%arg0: i32, %arg1: i32, %arg2: memref<64x128xi8, #tpu.memory_space<vmem>>, %arg3: memref<128x128xbf16, #tpu.memory_space<vmem>>, %arg4: memref<64x128xbf16, #tpu.memory_space<vmem>>, %arg5: memref<128x128xbf16, #tpu.memory_space<vmem>>, %arg6: memref<128x128xbf16, #tpu.memory_space<vmem>>, %arg7: memref<1x128xf32, #tpu.memory_space<vmem>>, %arg8: memref<64x128xf32, #tpu.memory_space<vmem>>, %arg9: memref<64x128xf32, #tpu.memory_space<vmem>>) attributes {dimension_semantics = [#tpu.dimension_semantics<parallel>, #tpu.dimension_semantics<arbitrary>], iteration_bounds = array<i64: 2, 1>, scalar_prefetch = 0 : i64, scratch_operands = 1 : i64, tpu.core_type = #tpu.core_type<tc>, window_params = [{transform_indices = @transform_0, window_bounds = array<i64: 64, 128>}, {transform_indices = @transform_1, window_bounds = array<i64: 128, 128>}, {transform_indices = @transform_2, window_bounds = array<i64: 64, 128>}, {pipeline_mode = #tpu.pipeline_mode<synchronous>, transform_indices = @transform_3, window_bounds = array<i64: 128, 128>}, {pipeline_mode = #tpu.pipeline_mode<synchronous>, transform_indices = @transform_4, window_bounds = array<i64: 128, 128>}, {pipeline_mode = #tpu.pipeline_mode<synchronous>, transform_indices = @transform_5, window_bounds = array<i64: 1, 128>}, {transform_indices = @transform_6, window_bounds = array<i64: 64, 128>}]} {
    %c0_i32 = arith.constant 0 : i32
    %0 = arith.cmpi eq, %arg1, %c0_i32 : i32
    %1 = arith.extui %0 : i1 to i32
    %c0_i32_0 = arith.constant 0 : i32
    %2 = arith.cmpi ne, %1, %c0_i32_0 : i32
    scf.if %2 {
      %cst_10 = arith.constant 0.000000e+00 : f32
      %13 = vector.broadcast %cst_10 : f32 to vector<64x128xf32>
      %c0_11 = arith.constant 0 : index
      %c0_12 = arith.constant 0 : index
      %14 = vector.load %arg9[%c0_11, %c0_12] : memref<64x128xf32, #tpu.memory_space<vmem>>, vector<64x128xf32>
      tpu.vector_store %arg9[%c0_11, %c0_12], %13 {strides = array<i32>} : memref<64x128xf32, #tpu.memory_space<vmem>>, vector<64x128xf32>,
    } else {
    }
    %c0 = arith.constant 0 : index
    %c0_1 = arith.constant 0 : index
    %3 = vector.load %arg2[%c0, %c0_1] : memref<64x128xi8, #tpu.memory_space<vmem>>, vector<64x128xi8>
    %4 = arith.sitofp %3 : vector<64x128xi8> to vector<64x128xbf16>
    %c0_2 = arith.constant 0 : index
    %c0_3 = arith.constant 0 : index
    %5 = vector.load %arg9[%c0_2, %c0_3] : memref<64x128xf32, #tpu.memory_space<vmem>>, vector<64x128xf32>
    %c0_4 = arith.constant 0 : index
    %c0_5 = arith.constant 0 : index
    %6 = vector.load %arg3[%c0_4, %c0_5] : memref<128x128xbf16, #tpu.memory_space<vmem>>, vector<128x128xbf16>
    %cst = arith.constant dense<0.000000e+00> : vector<64x128xf32>
    %7 = tpu.matmul %4, %6, %cst {dimension_numbers = #tpu.dot_dimension_numbers<[1], [0], [0], [1], [0, 0, 1, 1], [], []>} : vector<64x128xbf16>, vector<128x128xbf16>, vector<64x128xf32> -> vector<64x128xf32>
    %8 = arith.addf %5, %7 : vector<64x128xf32>
    %c0_6 = arith.constant 0 : index
    %c0_7 = arith.constant 0 : index
    %9 = vector.load %arg9[%c0_6, %c0_7] : memref<64x128xf32, #tpu.memory_space<vmem>>, vector<64x128xf32>
    tpu.vector_store %arg9[%c0_6, %c0_7], %8 {strides = array<i32>} : memref<64x128xf32, #tpu.memory_space<vmem>>, vector<64x128xf32>,
    %c0_i32_8 = arith.constant 0 : i32
    %10 = arith.cmpi eq, %arg1, %c0_i32_8 : i32
    %11 = arith.extui %10 : i1 to i32
    %c0_i32_9 = arith.constant 0 : i32
    %12 = arith.cmpi ne, %11, %c0_i32_9 : i32
    scf.if %12 {
      %c0_10 = arith.constant 0 : index
      %c0_11 = arith.constant 0 : index
      %13 = vector.load %arg9[%c0_10, %c0_11] : memref<64x128xf32, #tpu.memory_space<vmem>>, vector<64x128xf32>
      %14 = vector.extract_strided_slice %13 {offsets = [0, 32], sizes = [64, 1], strides = [1, 1]} : vector<64x128xf32> to vector<64x1xf32>
      %cst_12 = arith.constant 0.000000e+00 : f32
      %15 = vector.broadcast %cst_12 : f32 to vector<64x1xf32>
      %16 = arith.cmpf ogt, %14, %15 : vector<64x1xf32>
      %cst_13 = arith.constant 1.000000e+00 : f32
      %17 = vector.broadcast %cst_13 : f32 to vector<64x1xf32>
      %18 = arith.maximumf %14, %17 : vector<64x1xf32>
      %19 = tpu.reciprocal %18 {approx = true} : vector<64x1xf32> -> vector<64x1xf32>
      %cst_14 = arith.constant 0.000000e+00 : f32
      %20 = vector.broadcast %cst_14 : f32 to vector<64x1xf32>
      %21 = arith.select %16, %19, %20 : vector<64x1xi1>, vector<64x1xf32>
      %22 = vector.broadcast %21 : vector<64x1xf32> to vector<64x128xf32>
      %23 = arith.mulf %13, %22 : vector<64x128xf32>
      %24 = arith.truncf %23 : vector<64x128xf32> to vector<64x128xbf16>
      %c0_15 = arith.constant 0 : index
      %c0_16 = arith.constant 0 : index
      %25 = vector.load %arg4[%c0_15, %c0_16] : memref<64x128xbf16, #tpu.memory_space<vmem>>, vector<64x128xbf16>
      %c0_17 = arith.constant 0 : index
      %c0_18 = arith.constant 0 : index
      %26 = vector.load %arg5[%c0_17, %c0_18] : memref<128x128xbf16, #tpu.memory_space<vmem>>, vector<128x128xbf16>
      %cst_19 = arith.constant dense<0.000000e+00> : vector<64x128xf32>
      %27 = tpu.matmul %25, %26, %cst_19 {dimension_numbers = #tpu.dot_dimension_numbers<[1], [0], [0], [1], [0, 0, 1, 1], [], []>} : vector<64x128xbf16>, vector<128x128xbf16>, vector<64x128xf32> -> vector<64x128xf32>
      %c0_20 = arith.constant 0 : index
      %c0_21 = arith.constant 0 : index
      %28 = vector.load %arg6[%c0_20, %c0_21] : memref<128x128xbf16, #tpu.memory_space<vmem>>, vector<128x128xbf16>
      %cst_22 = arith.constant dense<0.000000e+00> : vector<64x128xf32>
      %29 = tpu.matmul %24, %28, %cst_22 {dimension_numbers = #tpu.dot_dimension_numbers<[1], [0], [0], [1], [0, 0, 1, 1], [], []>} : vector<64x128xbf16>, vector<128x128xbf16>, vector<64x128xf32> -> vector<64x128xf32>
      %30 = arith.addf %27, %29 : vector<64x128xf32>
      %c0_23 = arith.constant 0 : index
      %c0_24 = arith.constant 0 : index
      %31 = vector.load %arg7[%c0_23, %c0_24] : memref<1x128xf32, #tpu.memory_space<vmem>>, vector<1x128xf32>
      %32 = vector.broadcast %31 : vector<1x128xf32> to vector<64x128xf32>
      %33 = arith.addf %30, %32 : vector<64x128xf32>
      %cst_25 = arith.constant 0.000000e+00 : f32
      %34 = vector.broadcast %cst_25 : f32 to vector<64x128xf32>
      %35 = arith.maximumf %33, %34 : vector<64x128xf32>
      %c0_26 = arith.constant 0 : index
      %c0_27 = arith.constant 0 : index
      %36 = vector.load %arg8[%c0_26, %c0_27] : memref<64x128xf32, #tpu.memory_space<vmem>>, vector<64x128xf32>
      tpu.vector_store %arg8[%c0_26, %c0_27], %35 {strides = array<i32>} : memref<64x128xf32, #tpu.memory_space<vmem>>, vector<64x128xf32>,
    } else {
    }
    return
  }
  func.func @transform_0(%arg0: i32, %arg1: i32) -> (i32, i32) {
    %c0_i32 = arith.constant 0 : i32
    return %arg0, %arg1 : i32, i32
  }
  func.func @transform_1(%arg0: i32, %arg1: i32) -> (i32, i32) {
    %c0_i32 = arith.constant 0 : i32
    %c0_i32_0 = arith.constant 0 : i32
    return %arg1, %c0_i32 : i32, i32
  }
  func.func @transform_2(%arg0: i32, %arg1: i32) -> (i32, i32) {
    %c0_i32 = arith.constant 0 : i32
    %c0_i32_0 = arith.constant 0 : i32
    return %arg0, %c0_i32 : i32, i32
  }
  func.func @transform_3(%arg0: i32, %arg1: i32) -> (i32, i32) {
    %c0_i32 = arith.constant 0 : i32
    %c0_i32_0 = arith.constant 0 : i32
    %c0_i32_1 = arith.constant 0 : i32
    return %c0_i32, %c0_i32_0 : i32, i32
  }
  func.func @transform_4(%arg0: i32, %arg1: i32) -> (i32, i32) {
    %c0_i32 = arith.constant 0 : i32
    %c0_i32_0 = arith.constant 0 : i32
    %c0_i32_1 = arith.constant 0 : i32
    return %c0_i32, %c0_i32_0 : i32, i32
  }
  func.func @transform_5(%arg0: i32, %arg1: i32) -> (i32, i32) {
    %c0_i32 = arith.constant 0 : i32
    %c0_i32_0 = arith.constant 0 : i32
    %c0_i32_1 = arith.constant 0 : i32
    return %c0_i32, %c0_i32_0 : i32, i32
  }
  func.func @transform_6(%arg0: i32, %arg1: i32) -> (i32, i32) {
    %c0_i32 = arith.constant 0 : i32
    %c0_i32_0 = arith.constant 0 : i32
    return %arg0, %c0_i32 : i32, i32
  }
}

</mosaic_0001>

<llo_original>
// kernel: tpu_custom_call.1
$region0: #{tpu_custom_call.1}
  #allocation0 [shape = 'u32[]', space=smem, size = 0x4, offset = 0x4, fixed_abs, tag = 'smem constant byte address 0x4 - core index']
  #allocation1 [shape = 'u32[144,128]{1,0:T(1,128)}', space=vmem, size = 0x12000, scoped, tag = 'internal scratch']
  #allocation2 [shape = 'f32[64,128]{1,0:T(8,128)}', space=vmem, size = 0x8000, scoped, tag = 'scratch operand']
  %s0 = inlined_call_operand.hbm [shape: s8[128,128], index: 0, kind: input, shape index: {}]
  %s1 = inlined_call_operand.hbm [shape: bf16[128,128], index: 1, kind: input, shape index: {}]
  %s2 = inlined_call_operand.hbm [shape: bf16[128,128], index: 2, kind: input, shape index: {}]
  %s3 = inlined_call_operand.hbm [shape: bf16[128,128], index: 3, kind: input, shape index: {}]
  %s4 = inlined_call_operand.hbm [shape: bf16[128,128], index: 4, kind: input, shape index: {}]
  %s5 = inlined_call_operand.vmem [shape: f32[1,128], index: 5, kind: input, shape index: {}]
  %s6 = inlined_call_operand.hbm [shape: f32[128,128], index: 6, kind: output, shape index: {}]
  %s7 = sld [smem:[#allocation0]]
  $region85: #{tpu_custom_call.1} parent=0
    _
  %s9 = ssub.s32 1, %s7
  %s10 = scalar_select 0, %s9, %s7
  $region1: #{tpu_custom_call.1} parent=0
    #allocation3 [shape = 'u8[16384]{0}', space=vmem, size = 0x4000, scoped, tag = 'input window, operand 0']
    #allocation4 [shape = 's32[2]{0}', space=sflag, size = 0x8, scoped, tag = 'scoped memory for tpu_custom_call.1']
    #allocation5 [shape = 's32[2]{0}', space=sflag, size = 0x8, scoped, tag = 'scoped memory for tpu_custom_call.1']
    #allocation6 [shape = 'u8[32768]{0}', space=vmem, size = 0x8000, scoped, tag = 'input window, operand 1, single buffered']
    #allocation7 [shape = 's32[1]{0}', space=sflag, size = 0x4, scoped, tag = 'scoped memory for tpu_custom_call.1']
    #allocation8 [shape = 'u8[32768]{0}', space=vmem, size = 0x8000, scoped, tag = 'input window, operand 2']
    #allocation9 [shape = 'u8[32768]{0}', space=vmem, size = 0x8000, scoped, tag = 'input window, operand 3, single buffered']
    #allocation10 [shape = 'u8[32768]{0}', space=vmem, size = 0x8000, scoped, tag = 'input window, operand 4, single buffered']
    #allocation11 [shape = 's32[1]{0}', space=sflag, size = 0x4, scoped, tag = 'scoped memory for tpu_custom_call.1']
    #allocation12 [shape = 'u8[65536]{0}', space=vmem, size = 0x10000, scoped, tag = 'output window, operand 0']
    %11 = vsyncpa [#allocation4], 0
    %s12 = scalar_lea.sflag [#allocation4], 1
    %13 = vsyncpa %s12, 0
    %14 = vsyncpa [#allocation7], 0
    %15 = vsyncpa [#allocation11], 0
    %16 = vsyncpa [#allocation5], 0
    %s17 = scalar_lea.sflag [#allocation5], 1
    %18 = vsyncpa %s17, 0
    loop: start=0, step=1, limit=4
    $region2: #{tpu_custom_call.1} parent=1 // loop_pre_header
      _
    $region3: #{tpu_custom_call.1} parent=1 // loop_header
      %s20 = sphi 0, %s24
      %p21 = scmp.ge.s32.totalorder %s20, 4
      %s27 = sphi 0, %s39
      %s28 = sphi 0, %s35
      %s29 = sphi 0, %s27
      %s30 = sphi 0, %s28
      %s31 = sphi 0, %s29
      %s32 = sphi 0, %s30
      %s44 = sphi 0, %s46
      %s47 = sphi 0, %s44
      %s48 = sphi 0, %s47
      %s64 = sphi 0, %s48
      %s70 = sphi 0, %s72
      %s73 = sphi 0, %s70
      %s74 = sphi 0, %s73
      %s90 = sphi 0, %s74
      %s96 = sphi 0, %s98
      %s99 = sphi 0, %s96
      %s100 = sphi 0, %s99
      %s116 = sphi 0, %s100
      %s120 = sphi 0, %s120
      %s122 = sphi 0, %s120
      %s123 = sphi 0, %s122
      %s137 = sphi 0, %s123
      %s141 = sphi 0, %s141
      %s143 = sphi 0, %s141
      %s144 = sphi 0, %s143
      %s158 = sphi 0, %s144
      %s162 = sphi 0, %s162
      %s164 = sphi 0, %s162
      %s165 = sphi 0, %s164
      %s179 = sphi 0, %s165
      %s185 = sphi 0, %s187
      %s188 = sphi 0, %s185
      %s189 = sphi 0, %s188
      %s205 = sphi 0, %s189
    $region4: #{tpu_custom_call.1} parent=1 // loop_header_branch
      %23 = sbr.rel (%p21) target = $region8
    $region5: #{tpu_custom_call.1} parent=1 // loop_body
      %s25 = ssub.s32 %s20, 1
      %s26 = ssub.s32 %s20, 2
      %s33 = sadd.s32 1, %s28
      %p34 = scmp.ge.s32.totalorder %s33, 1
      %s35 = scalar_select %p34, 0, %s33
      %s36 = sadd.s32 1, %s27
      %s37 = scalar_select %p34, %s36, %s27
      %p38 = scmp.ge.s32.totalorder %s37, 2
      %s39 = scalar_select %p38, 0, %s37
      %s40 = ssub.s32 %s27, %s39
      %s41 = ssub.s32 %s28, %s35
      %s42 = sor.u32 %s40, %s41
      %p43 = scmp.eq.s32.totalorder %s42, 0
      %s45 = sadd.s32 %s44, 1
      %s46 = scalar_select %p43, %s44, %s45
      %p49 = pneg %p43
      %p50 = scmp.eq.s32.totalorder %s20, 1
      %p51 = por %p49, %p50
      %p52 = scmp.ne.s32.totalorder %s44, %s47
      %p53 = scmp.eq.s32.totalorder %s20, 0
      %p54 = por %p52, %p53
      %p55 = scmp.ne.s32.totalorder %s44, %s47
      %p56 = scmp.eq.s32.totalorder %s25, 1
      %p57 = por %p55, %p56
      %p58 = scmp.ne.s32.totalorder %s47, %s48
      %p59 = scmp.eq.s32.totalorder %s25, 0
      %p60 = por %p58, %p59
      %p61 = scmp.ne.s32.totalorder %s47, %s48
      %p62 = scmp.eq.s32.totalorder %s26, 1
      %p63 = por %p61, %p62
      %p65 = scmp.ne.s32.totalorder %s48, %s64
      %p66 = scmp.eq.s32.totalorder %s26, 0
      %p67 = por %p65, %p66
      %s68 = ssub.s32 %s28, %s35
      %p69 = scmp.eq.s32.totalorder %s68, 0
      %s71 = sadd.s32 %s70, 1
      %s72 = scalar_select %p69, %s70, %s71
      %p75 = pneg %p69
      %p76 = scmp.eq.s32.totalorder %s20, 1
      %p77 = por %p75, %p76
      %p78 = scmp.ne.s32.totalorder %s70, %s73
      %p79 = scmp.eq.s32.totalorder %s20, 0
      %p80 = por %p78, %p79
      %p81 = scmp.ne.s32.totalorder %s70, %s73
      %p82 = scmp.eq.s32.totalorder %s25, 1
      %p83 = por %p81, %p82
      %p84 = scmp.ne.s32.totalorder %s73, %s74
      %p85 = scmp.eq.s32.totalorder %s25, 0
      %p86 = por %p84, %p85
      %p87 = scmp.ne.s32.totalorder %s73, %s74
      %p88 = scmp.eq.s32.totalorder %s26, 1
      %p89 = por %p87, %p88
      %p91 = scmp.ne.s32.totalorder %s74, %s90
      %p92 = scmp.eq.s32.totalorder %s26, 0
      %p93 = por %p91, %p92
      %s94 = ssub.s32 %s27, %s39
      %p95 = scmp.eq.s32.totalorder %s94, 0
      %s97 = sadd.s32 %s96, 1
      %s98 = scalar_select %p95, %s96, %s97
      %p101 = pneg %p95
      %p102 = scmp.eq.s32.totalorder %s20, 1
      %p103 = por %p101, %p102
      %p104 = scmp.ne.s32.totalorder %s96, %s99
      %p105 = scmp.eq.s32.totalorder %s20, 0
      %p106 = por %p104, %p105
      %p107 = scmp.ne.s32.totalorder %s96, %s99
      %p108 = scmp.eq.s32.totalorder %s25, 1
      %p109 = por %p107, %p108
      %p110 = scmp.ne.s32.totalorder %s99, %s100
      %p111 = scmp.eq.s32.totalorder %s25, 0
      %p112 = por %p110, %p111
      %p113 = scmp.ne.s32.totalorder %s99, %s100
      %p114 = scmp.eq.s32.totalorder %s26, 1
      %p115 = por %p113, %p114
      %p117 = scmp.ne.s32.totalorder %s100, %s116
      %p118 = scmp.eq.s32.totalorder %s26, 0
      %p119 = por %p117, %p118
      %s121 = sadd.s32 %s120, 1
      %p124 = scmp.eq.s32.totalorder %s20, 1
      %p125 = scmp.ne.s32.totalorder %s120, %s122
      %p126 = scmp.eq.s32.totalorder %s20, 0
      %p127 = por %p125, %p126
      %p128 = scmp.ne.s32.totalorder %s120, %s122
      %p129 = scmp.eq.s32.totalorder %s25, 1
      %p130 = por %p128, %p129
      %p131 = scmp.ne.s32.totalorder %s122, %s123
      %p132 = scmp.eq.s32.totalorder %s25, 0
      %p133 = por %p131, %p132
      %p134 = scmp.ne.s32.totalorder %s122, %s123
      %p135 = scmp.eq.s32.totalorder %s26, 1
      %p136 = por %p134, %p135
      %p138 = scmp.ne.s32.totalorder %s123, %s137
      %p139 = scmp.eq.s32.totalorder %s26, 0
      %p140 = por %p138, %p139
      %s142 = sadd.s32 %s141, 1
      %p145 = scmp.eq.s32.totalorder %s20, 1
      %p146 = scmp.ne.s32.totalorder %s141, %s143
      %p147 = scmp.eq.s32.totalorder %s20, 0
      %p148 = por %p146, %p147
      %p149 = scmp.ne.s32.totalorder %s141, %s143
      %p150 = scmp.eq.s32.totalorder %s25, 1
      %p151 = por %p149, %p150
      %p152 = scmp.ne.s32.totalorder %s143, %s144
      %p153 = scmp.eq.s32.totalorder %s25, 0
      %p154 = por %p152, %p153
      %p155 = scmp.ne.s32.totalorder %s143, %s144
      %p156 = scmp.eq.s32.totalorder %s26, 1
      %p157 = por %p155, %p156
      %p159 = scmp.ne.s32.totalorder %s144, %s158
      %p160 = scmp.eq.s32.totalorder %s26, 0
      %p161 = por %p159, %p160
      %s163 = sadd.s32 %s162, 1
      %p166 = scmp.eq.s32.totalorder %s20, 1
      %p167 = scmp.ne.s32.totalorder %s162, %s164
      %p168 = scmp.eq.s32.totalorder %s20, 0
      %p169 = por %p167, %p168
      %p170 = scmp.ne.s32.totalorder %s162, %s164
      %p171 = scmp.eq.s32.totalorder %s25, 1
      %p172 = por %p170, %p171
      %p173 = scmp.ne.s32.totalorder %s164, %s165
      %p174 = scmp.eq.s32.totalorder %s25, 0
      %p175 = por %p173, %p174
      %p176 = scmp.ne.s32.totalorder %s164, %s165
      %p177 = scmp.eq.s32.totalorder %s26, 1
      %p178 = por %p176, %p177
      %p180 = scmp.ne.s32.totalorder %s165, %s179
      %p181 = scmp.eq.s32.totalorder %s26, 0
      %p182 = por %p180, %p181
      %s183 = ssub.s32 %s27, %s39
      %p184 = scmp.eq.s32.totalorder %s183, 0
      %s186 = sadd.s32 %s185, 1
      %s187 = scalar_select %p184, %s185, %s186
      %p190 = pneg %p184
      %p191 = scmp.eq.s32.totalorder %s20, 1
      %p192 = por %p190, %p191
      %p193 = scmp.ne.s32.totalorder %s185, %s188
      %p194 = scmp.eq.s32.totalorder %s20, 0
      %p195 = por %p193, %p194
      %p196 = scmp.ne.s32.totalorder %s185, %s188
      %p197 = scmp.eq.s32.totalorder %s25, 1
      %p198 = por %p196, %p197
      %p199 = scmp.ne.s32.totalorder %s188, %s189
      %p200 = scmp.eq.s32.totalorder %s25, 0
      %p201 = por %p199, %p200
      %p202 = scmp.ne.s32.totalorder %s188, %s189
      %p203 = scmp.eq.s32.totalorder %s26, 1
      %p204 = por %p202, %p203
      %p206 = scmp.ne.s32.totalorder %s189, %s205
      %p207 = scmp.eq.s32.totalorder %s26, 0
      %p208 = por %p206, %p207
      %p209 = scmp.le.s32.totalorder 1, %s20
      %p210 = scmp.lt.s32.totalorder %s20, 3
      %p211 = pnand %p209, %p210
      %p212 = pneg %p211
      // Predicated region
      $region9: #{tpu_custom_call.1} parent=5 // pred_check
        _
      $region10: #{tpu_custom_call.1} parent=5 // pred_check_branch
        %214 = sbr.rel (%p211) target = $region12
      $region11: #{tpu_custom_call.1} parent=5 // pred_region
        %s215 = ssub.s32 %s20, 1
        // Predicated region
        $region13: #{tpu_custom_call.1} parent=11 // pred_check
          %p216 = pneg %p86
        $region14: #{tpu_custom_call.1} parent=11 // pred_check_branch
          %218 = sbr.rel (%p216) target = $region16
        $region15: #{tpu_custom_call.1} parent=11 // pred_region
          %s219 = smul.u32 16, %s30
          %s221 = ssub.s32 1024, 1024
          %222 = vsyncadd [#allocation7], %s221
          %s223 = smul.addr %s219, 64
          %s224 = scalar_lea.hbm %s1, %s223
          %s225 = sshll.u32 [#allocation6], 4
          %s226 = int_to_ptr.vmem [resolvable:$true] %s225
          %231 = dma.hbm_to_vmem [thread:$0]  %s224, 1024, %s226, [#allocation7], 64, 64, 4
        $region16: #{tpu_custom_call.1} parent=11 // pred_fallthru
          _
        // Predicated region
        $region17: #{tpu_custom_call.1} parent=11 // pred_check
          %p232 = pneg %p133
        $region18: #{tpu_custom_call.1} parent=11 // pred_check_branch
          %234 = sbr.rel (%p232) target = $region20
        $region19: #{tpu_custom_call.1} parent=11 // pred_region
          %s236 = ssub.s32 1024, 1024
          %237 = vsyncadd [#allocation7], %s236
          %s238 = sshll.u32 [#allocation9], 4
          %s239 = int_to_ptr.vmem [resolvable:$true] %s238
          %244 = dma.hbm_to_vmem [thread:$0]  %s3, 1024, %s239, [#allocation7], 64, 64, 4
        $region20: #{tpu_custom_call.1} parent=11 // pred_fallthru
          _
        // Predicated region
        $region21: #{tpu_custom_call.1} parent=11 // pred_check
          %p245 = pneg %p154
        $region22: #{tpu_custom_call.1} parent=11 // pred_check_branch
          %247 = sbr.rel (%p245) target = $region24
        $region23: #{tpu_custom_call.1} parent=11 // pred_region
          %s249 = ssub.s32 1024, 1024
          %250 = vsyncadd [#allocation11], %s249
          %s251 = sshll.u32 [#allocation10], 4
          %s252 = int_to_ptr.vmem [resolvable:$true] %s251
          %257 = dma.hbm_to_vmem [thread:$0]  %s4, 1024, %s252, [#allocation11], 64, 64, 4
        $region24: #{tpu_custom_call.1} parent=11 // pred_fallthru
          _
        // Predicated region
        $region25: #{tpu_custom_call.1} parent=11 // pred_check
          %p258 = pneg %p175
        $region26: #{tpu_custom_call.1} parent=11 // pred_check_branch
          %260 = sbr.rel (%p258) target = $region28
        $region27: #{tpu_custom_call.1} parent=11 // pred_region
          _
        $region28: #{tpu_custom_call.1} parent=11 // pred_fallthru
          _
      $region12: #{tpu_custom_call.1} parent=5 // pred_fallthru
        _
      %p261 = scmp.lt.s32.totalorder %s20, 2
      // Predicated region
      $region29: #{tpu_custom_call.1} parent=5 // pred_check
        %p262 = pneg %p261
      $region30: #{tpu_custom_call.1} parent=5 // pred_check_branch
        %264 = sbr.rel (%p262) target = $region32
      $region31: #{tpu_custom_call.1} parent=5 // pred_region
        // Predicated region
        $region33: #{tpu_custom_call.1} parent=31 // pred_check
          %p265 = pneg %p54
        $region34: #{tpu_custom_call.1} parent=31 // pred_check_branch
          %267 = sbr.rel (%p265) target = $region36
        $region35: #{tpu_custom_call.1} parent=31 // pred_region
          %s268 = sand.u32 %s20, 1
          %s269 = scalar_lea.sflag [#allocation4], %s268
          %s270 = sand.u32 %s44, 1
          %s271 = smul.addr %s270, 16
          %s272 = scalar_lea.vmem [#allocation3], %s271
          %s273 = smul.u32 2, %s27
          %s275 = ssub.s32 256, 256
          %276 = vsyncadd %s269, %s275
          %s277 = sadd.s32 %s28, %s273
          %s278 = smul.addr %s277, 128
          %s279 = scalar_lea.hbm %s0, %s278
          %s280 = sshll.u32 %s272, 4
          %s281 = int_to_ptr.vmem [resolvable:$true] %s280
          %286 = dma.hbm_to_vmem [thread:$0]  %s279, 256, %s281, %s269, 128, 128, 8
        $region36: #{tpu_custom_call.1} parent=31 // pred_fallthru
          _
        // Predicated region
        $region37: #{tpu_custom_call.1} parent=31 // pred_check
          %p287 = pneg %p106
        $region38: #{tpu_custom_call.1} parent=31 // pred_check_branch
          %289 = sbr.rel (%p287) target = $region40
        $region39: #{tpu_custom_call.1} parent=31 // pred_region
          %s290 = sand.u32 %s20, 1
          %s291 = scalar_lea.sflag [#allocation4], %s290
          %s292 = sand.u32 %s96, 1
          %s293 = smul.addr %s292, 32
          %s294 = scalar_lea.vmem [#allocation8], %s293
          %s295 = smul.u32 8, %s27
          %s297 = ssub.s32 512, 512
          %298 = vsyncadd %s291, %s297
          %s299 = smul.addr %s295, 64
          %s300 = scalar_lea.hbm %s2, %s299
          %s301 = sshll.u32 %s294, 4
          %s302 = int_to_ptr.vmem [resolvable:$true] %s301
          %307 = dma.hbm_to_vmem [thread:$0]  %s300, 512, %s302, %s291, 64, 64, 4
        $region40: #{tpu_custom_call.1} parent=31 // pred_fallthru
          _
      $region32: #{tpu_custom_call.1} parent=5 // pred_fallthru
        _
      %p308 = scmp.le.s32.totalorder 1, %s20
      %p309 = scmp.lt.s32.totalorder %s20, 3
      %p310 = pnand %p308, %p309
      %p311 = pneg %p310
      // Predicated region
      $region41: #{tpu_custom_call.1} parent=5 // pred_check
        _
      $region42: #{tpu_custom_call.1} parent=5 // pred_check_branch
        %313 = sbr.rel (%p310) target = $region44
      $region43: #{tpu_custom_call.1} parent=5 // pred_region
        %s314 = ssub.s32 %s20, 1
        %s315 = sand.u32 %s25, 1
        %s316 = scalar_lea.sflag [#allocation4], %s315
        %s317 = sand.u32 %s47, 1
        %s318 = smul.addr %s317, 16
        %s319 = scalar_lea.vmem [#allocation3], %s318
        // Predicated region
        $region45: #{tpu_custom_call.1} parent=43 // pred_check
          %p320 = pneg %p60
        $region46: #{tpu_custom_call.1} parent=43 // pred_check_branch
          %322 = sbr.rel (%p320) target = $region48
        $region47: #{tpu_custom_call.1} parent=43 // pred_region
          %323 = dma.done %s316, 256
        $region48: #{tpu_custom_call.1} parent=43 // pred_fallthru
          _
        // Predicated region
        $region49: #{tpu_custom_call.1} parent=43 // pred_check
          %p324 = pneg %p86
        $region50: #{tpu_custom_call.1} parent=43 // pred_check_branch
          %326 = sbr.rel (%p324) target = $region52
        $region51: #{tpu_custom_call.1} parent=43 // pred_region
          %327 = dma.done [#allocation7], 1024
        $region52: #{tpu_custom_call.1} parent=43 // pred_fallthru
          _
        %s328 = sand.u32 %s25, 1
        %s329 = scalar_lea.sflag [#allocation4], %s328
        %s330 = sand.u32 %s99, 1
        %s331 = smul.addr %s330, 32
        %s332 = scalar_lea.vmem [#allocation8], %s331
        // Predicated region
        $region53: #{tpu_custom_call.1} parent=43 // pred_check
          %p333 = pneg %p112
        $region54: #{tpu_custom_call.1} parent=43 // pred_check_branch
          %335 = sbr.rel (%p333) target = $region56
        $region55: #{tpu_custom_call.1} parent=43 // pred_region
          %336 = dma.done %s329, 512
        $region56: #{tpu_custom_call.1} parent=43 // pred_fallthru
          _
        // Predicated region
        $region57: #{tpu_custom_call.1} parent=43 // pred_check
          %p337 = pneg %p133
        $region58: #{tpu_custom_call.1} parent=43 // pred_check_branch
          %339 = sbr.rel (%p337) target = $region60
        $region59: #{tpu_custom_call.1} parent=43 // pred_region
          %340 = dma.done [#allocation7], 1024
        $region60: #{tpu_custom_call.1} parent=43 // pred_fallthru
          _
        // Predicated region
        $region61: #{tpu_custom_call.1} parent=43 // pred_check
          %p341 = pneg %p154
        $region62: #{tpu_custom_call.1} parent=43 // pred_check_branch
          %343 = sbr.rel (%p341) target = $region64
        $region63: #{tpu_custom_call.1} parent=43 // pred_region
          %344 = dma.done [#allocation11], 1024
        $region64: #{tpu_custom_call.1} parent=43 // pred_fallthru
          _
        %s345 = sand.u32 %s25, 1
        %s346 = scalar_lea.sflag [#allocation4], %s345
        %s347 = sand.u32 %s47, 1
        %s348 = smul.addr %s347, 16
        %s349 = scalar_lea.vmem [#allocation3], %s348
        %p350 = pneg %p60
        %p351 = pneg %p57
        %p352 = pneg %p86
        %p353 = pneg %p83
        %s354 = sand.u32 %s25, 1
        %s355 = scalar_lea.sflag [#allocation4], %s354
        %s356 = sand.u32 %s99, 1
        %s357 = smul.addr %s356, 32
        %s358 = scalar_lea.vmem [#allocation8], %s357
        %p359 = pneg %p112
        %p360 = pneg %p109
        %p361 = pneg %p133
        %p362 = pneg %p130
        %p363 = pneg %p154
        %p364 = pneg %p151
        %p365 = pneg %p175
        %p366 = pneg %p172
        %p367 = pneg %p201
        %p368 = pneg %p198
        %s369 = sand.u32 %s188, 1
        %s370 = scalar_lea.sflag [#allocation5], %s369
        %s371 = sand.u32 %s188, 1
        %s372 = smul.addr %s371, 64
        %s373 = scalar_lea.vmem [#allocation12], %s372
        %s374 = smul.u32 2, %s29
        %s375 = smul.u32 16, %s30
        %s376 = smul.u32 8, %s29
        %s377 = smul.u32 8, %s29
        %p379 = scmp.eq.s32.totalorder %s30, 0
        // Predicated region
        $region65: #{tpu_custom_call.1} parent=43 // pred_check
          %p380 = pneg %p379
        $region66: #{tpu_custom_call.1} parent=43 // pred_check_branch
          %382 = sbr.rel (%p380) target = $region68
        $region67: #{tpu_custom_call.1} parent=43 // pred_region
          %383 = vst [vmem:[#allocation2] sm:$0xff] 0.0
          %384 = vst [vmem:[#allocation2 + $0x8] sm:$0xff] 0.0
          %385 = vst [vmem:[#allocation2 + $0x10] sm:$0xff] 0.0
          %386 = vst [vmem:[#allocation2 + $0x18] sm:$0xff] 0.0
          %387 = vst [vmem:[#allocation2 + $0x20] sm:$0xff] 0.0
          %388 = vst [vmem:[#allocation2 + $0x28] sm:$0xff] 0.0
          %389 = vst [vmem:[#allocation2 + $0x30] sm:$0xff] 0.0
          %390 = vst [vmem:[#allocation2 + $0x38] sm:$0xff] 0.0
        $region68: #{tpu_custom_call.1} parent=43 // pred_fallthru
          _
        %v391 = vld [vmem:[%s319] sm:$0xff]
        %v392 = vld [vmem:[%s319 + $0x8] sm:$0xff]
        %v393 = vunpack.c.l.s8.bf16 %v391
        %v394 = vunpack.c.h.s8.bf16 %v391
        %v395 = vunpack.c.l.s8.bf16 %v392
        %v396 = vunpack.c.h.s8.bf16 %v392
        %v397 = vld [vmem:[#allocation2] sm:$0xff]
        %v398 = vld [vmem:[#allocation2 + $0x8] sm:$0xff]
        %v399 = vld [vmem:[#allocation2 + $0x10] sm:$0xff]
        %v400 = vld [vmem:[#allocation2 + $0x18] sm:$0xff]
        %v401 = vld [vmem:[#allocation2 + $0x20] sm:$0xff]
        %v402 = vld [vmem:[#allocation2 + $0x28] sm:$0xff]
        %v403 = vld [vmem:[#allocation2 + $0x30] sm:$0xff]
        %v404 = vld [vmem:[#allocation2 + $0x38] sm:$0xff]
        %v405 = vld [vmem:[#allocation6] sm:$0xf]
        %v406 = vld [vmem:[#allocation6 + $0x4] sm:$0xf]
        %v407 = vld [vmem:[#allocation6 + $0x8] sm:$0xf]
        %v408 = vld [vmem:[#allocation6 + $0xc] sm:$0xf]
        %v409 = vld [vmem:[#allocation6 + $0x10] sm:$0xf]
        %v410 = vld [vmem:[#allocation6 + $0x14] sm:$0xf]
        %v411 = vld [vmem:[#allocation6 + $0x18] sm:$0xf]
        %v412 = vld [vmem:[#allocation6 + $0x1c] sm:$0xf]
        %v413 = vld [vmem:[#allocation6 + $0x20] sm:$0xf]
        %v414 = vld [vmem:[#allocation6 + $0x24] sm:$0xf]
        %v415 = vld [vmem:[#allocation6 + $0x28] sm:$0xf]
        %v416 = vld [vmem:[#allocation6 + $0x2c] sm:$0xf]
        %v417 = vld [vmem:[#allocation6 + $0x30] sm:$0xf]
        %v418 = vld [vmem:[#allocation6 + $0x34] sm:$0xf]
        %v419 = vld [vmem:[#allocation6 + $0x38] sm:$0xf]
        %v420 = vld [vmem:[#allocation6 + $0x3c] sm:$0xf]
        %v437 = vunpack.c.l.b16 %v405
        %v438 = vunpack.c.l.b16 %v406
        %v439 = vunpack.c.l.b16 %v407
        %v440 = vunpack.c.l.b16 %v408
        %v441 = vunpack.c.l.b16 %v409
        %v442 = vunpack.c.l.b16 %v410
        %v443 = vunpack.c.l.b16 %v411
        %v444 = vunpack.c.l.b16 %v412
        %v445 = vunpack.c.l.b16 %v413
        %v446 = vunpack.c.l.b16 %v414
        %v447 = vunpack.c.l.b16 %v415
        %v448 = vunpack.c.l.b16 %v416
        %v449 = vunpack.c.l.b16 %v417
        %v450 = vunpack.c.l.b16 %v418
        %v451 = vunpack.c.l.b16 %v419
        %v452 = vunpack.c.l.b16 %v420
        %v453 = vpack.c.b16 %v438, %v437
        %v454 = vpack.c.b16 %v440, %v439
        %v455 = vpack.c.b16 %v442, %v441
        %v456 = vpack.c.b16 %v444, %v443
        %v457 = vpack.c.b16 %v446, %v445
        %v458 = vpack.c.b16 %v448, %v447
        %v459 = vpack.c.b16 %v450, %v449
        %v460 = vpack.c.b16 %v452, %v451
        %469 = vmatprep.subr.bf16.mxu0 0
        %470 = vmatpush1.bf16.msra.mxu0 %v453
        %471 = vmatprep.subr.bf16.mxu0 0
        %472 = vmatpush1.bf16.msra.mxu0 %v454
        %473 = vmatprep.subr.bf16.mxu0 0
        %474 = vmatpush1.bf16.msra.mxu0 %v455
        %475 = vmatprep.subr.bf16.mxu0 0
        %476 = vmatpush1.bf16.msra.mxu0 %v456
        %477 = vmatprep.subr.bf16.mxu0 0
        %478 = vmatpush1.bf16.msra.mxu0 %v457
        %479 = vmatprep.subr.bf16.mxu0 0
        %480 = vmatpush1.bf16.msra.mxu0 %v458
        %481 = vmatprep.subr.bf16.mxu0 0
        %482 = vmatpush1.bf16.msra.mxu0 %v459
        %483 = vmatprep.subr.bf16.mxu0 0
        %484 = vmatpush1.bf16.msra.mxu0 %v460
        %485 = vmatprep.subr.bf16.mxu0 0
        %486 = vmatpush1.bf16.msra.mxu0 0
        %487 = vmatprep.subr.bf16.mxu0 0
        %488 = vmatpush1.bf16.msra.mxu0 0
        %489 = vmatprep.subr.bf16.mxu0 0
        %490 = vmatpush1.bf16.msra.mxu0 0
        %491 = vmatprep.subr.bf16.mxu0 0
        %492 = vmatpush1.bf16.msra.mxu0 0
        %493 = vmatprep.subr.bf16.mxu0 0
        %494 = vmatpush1.bf16.msra.mxu0 0
        %495 = vmatprep.subr.bf16.mxu0 0
        %496 = vmatpush1.bf16.msra.mxu0 0
        %497 = vmatprep.subr.bf16.mxu0 0
        %498 = vmatpush1.bf16.msra.mxu0 0
        %499 = vmatprep.subr.bf16.mxu0 0
        %500 = vmatpush1.bf16.msra.mxu0 0
        %501 = vmatprep.mubr.bf16.mxu0 0
        %502 = vmatmul.mubr.bf16.gmra.mrb[0].mxu0 %v393
        %v503 = vpop.f32.mrb[0].mxu0
        %v504 = vadd.f32 0.0, %v503
        %v505 = vpop.f32.mrb[0].mxu0
        %v506 = vpop.f32.mrb[0].mxu0
        %v507 = vadd.f32 0.0, %v506
        %v508 = vpop.f32.mrb[0].mxu0
        %509 = vmatprep.mubr.bf16.mxu0 0
        %510 = vmatmul.mubr.bf16.gmra.mrb[0].mxu0 %v394
        %v511 = vpop.f32.mrb[0].mxu0
        %v512 = vadd.f32 0.0, %v511
        %v513 = vpop.f32.mrb[0].mxu0
        %v514 = vpop.f32.mrb[0].mxu0
        %v515 = vadd.f32 0.0, %v514
        %v516 = vpop.f32.mrb[0].mxu0
        %517 = vmatprep.mubr.bf16.mxu0 0
        %518 = vmatmul.mubr.bf16.gmra.mrb[0].mxu0 %v395
        %v519 = vpop.f32.mrb[0].mxu0
        %v520 = vadd.f32 0.0, %v519
        %v521 = vpop.f32.mrb[0].mxu0
        %v522 = vpop.f32.mrb[0].mxu0
        %v523 = vadd.f32 0.0, %v522
        %v524 = vpop.f32.mrb[0].mxu0
        %525 = vmatprep.mubr.bf16.mxu0 0
        %526 = vmatmul.mubr.bf16.gmra.mrb[0].mxu0 %v396
        %v527 = vpop.f32.mrb[0].mxu0
        %v528 = vadd.f32 0.0, %v527
        %v529 = vpop.f32.mrb[0].mxu0
        %v530 = vpop.f32.mrb[0].mxu0
        %v531 = vadd.f32 0.0, %v530
        %v532 = vpop.f32.mrb[0].mxu0
        %533 = vdwg.mxu0
        %v534 = vadd.f32 %v397, %v504
        %v535 = vadd.f32 %v398, %v507
        %v536 = vadd.f32 %v399, %v512
        %v537 = vadd.f32 %v400, %v515
        %v538 = vadd.f32 %v401, %v520
        %v539 = vadd.f32 %v402, %v523
        %v540 = vadd.f32 %v403, %v528
        %v541 = vadd.f32 %v404, %v531
        %542 = vst [vmem:[#allocation2] sm:$0xff] %v534
        %543 = vst [vmem:[#allocation2 + $0x8] sm:$0xff] %v535
        %544 = vst [vmem:[#allocation2 + $0x10] sm:$0xff] %v536
        %545 = vst [vmem:[#allocation2 + $0x18] sm:$0xff] %v537
        %546 = vst [vmem:[#allocation2 + $0x20] sm:$0xff] %v538
        %547 = vst [vmem:[#allocation2 + $0x28] sm:$0xff] %v539
        %548 = vst [vmem:[#allocation2 + $0x30] sm:$0xff] %v540
        %549 = vst [vmem:[#allocation2 + $0x38] sm:$0xff] %v541
        // Predicated region
        $region69: #{tpu_custom_call.1} parent=43 // pred_check
          %p550 = pneg %p379
        $region70: #{tpu_custom_call.1} parent=43 // pred_check_branch
          %552 = sbr.rel (%p550) target = $region72
        $region71: #{tpu_custom_call.1} parent=43 // pred_region
          %v553 = vld [vmem:[#allocation2] sm:$0xff]
          %v554 = vld [vmem:[#allocation2 + $0x8] sm:$0xff]
          %v555 = vld [vmem:[#allocation2 + $0x10] sm:$0xff]
          %v556 = vld [vmem:[#allocation2 + $0x18] sm:$0xff]
          %v557 = vld [vmem:[#allocation2 + $0x20] sm:$0xff]
          %v558 = vld [vmem:[#allocation2 + $0x28] sm:$0xff]
          %v559 = vld [vmem:[#allocation2 + $0x30] sm:$0xff]
          %v560 = vld [vmem:[#allocation2 + $0x38] sm:$0xff]
          %vm561 = vcmp.gt.f32.partialorder %v553, 0.0
          %vm562 = vcmp.gt.f32.partialorder %v554, 0.0
          %vm563 = vcmp.gt.f32.partialorder %v555, 0.0
          %vm564 = vcmp.gt.f32.partialorder %v556, 0.0
          %vm565 = vcmp.gt.f32.partialorder %v557, 0.0
          %vm566 = vcmp.gt.f32.partialorder %v558, 0.0
          %vm567 = vcmp.gt.f32.partialorder %v559, 0.0
          %vm568 = vcmp.gt.f32.partialorder %v560, 0.0
          %v569 = vmax.f32 %v553, 1.0
          %v570 = vmax.f32 %v554, 1.0
          %v571 = vmax.f32 %v555, 1.0
          %v572 = vmax.f32 %v556, 1.0
          %v573 = vmax.f32 %v557, 1.0
          %v574 = vmax.f32 %v558, 1.0
          %v575 = vmax.f32 %v559, 1.0
          %v576 = vmax.f32 %v560, 1.0
          %v577 = vrcp.pop %v569
          %v578 = vrcp.pop %v570
          %v579 = vrcp.pop %v571
          %v580 = vrcp.pop %v572
          %v581 = vrcp.pop %v573
          %v582 = vrcp.pop %v574
          %v583 = vrcp.pop %v575
          %v584 = vrcp.pop %v576
          %v585 = vsel %vm561, %v577, 0.0
          %v586 = vsel %vm562, %v578, 0.0
          %v587 = vsel %vm563, %v579, 0.0
          %v588 = vsel %vm564, %v580, 0.0
          %v589 = vsel %vm565, %v581, 0.0
          %v590 = vsel %vm566, %v582, 0.0
          %v591 = vsel %vm567, %v583, 0.0
          %v592 = vsel %vm568, %v584, 0.0
          %594 = vset.pattern.permute.xlu0 32
          %595 = vperm.xlu0 %594, %v585
          %v596 = vpop.permute.xlu0 %595
          %599 = vset.pattern.permute.xlu0 32
          %600 = vperm.xlu0 %599, %v586
          %v601 = vpop.permute.xlu0 %600
          %604 = vset.pattern.permute.xlu0 32
          %605 = vperm.xlu0 %604, %v587
          %v606 = vpop.permute.xlu0 %605
          %609 = vset.pattern.permute.xlu0 32
          %610 = vperm.xlu0 %609, %v588
          %v611 = vpop.permute.xlu0 %610
          %614 = vset.pattern.permute.xlu0 32
          %615 = vperm.xlu0 %614, %v589
          %v616 = vpop.permute.xlu0 %615
          %619 = vset.pattern.permute.xlu0 32
          %620 = vperm.xlu0 %619, %v590
          %v621 = vpop.permute.xlu0 %620
          %624 = vset.pattern.permute.xlu0 32
          %625 = vperm.xlu0 %624, %v591
          %v626 = vpop.permute.xlu0 %625
          %629 = vset.pattern.permute.xlu0 32
          %630 = vperm.xlu0 %629, %v592
          %v631 = vpop.permute.xlu0 %630
          %v633 = vmul.f32 %v553, %v596
          %v634 = vmul.f32 %v554, %v601
          %v635 = vmul.f32 %v555, %v606
          %v636 = vmul.f32 %v556, %v611
          %v637 = vmul.f32 %v557, %v616
          %v638 = vmul.f32 %v558, %v621
          %v639 = vmul.f32 %v559, %v626
          %v640 = vmul.f32 %v560, %v631
          %v641 = vpack.c.bf16 %v634, %v633
          %v642 = vpack.c.bf16 %v636, %v635
          %v643 = vpack.c.bf16 %v638, %v637
          %v644 = vpack.c.bf16 %v640, %v639
          %v645 = vld [vmem:[%s332] sm:$0xf]
          %v646 = vld [vmem:[%s332 + $0x4] sm:$0xf]
          %v647 = vld [vmem:[%s332 + $0x8] sm:$0xf]
          %v648 = vld [vmem:[%s332 + $0xc] sm:$0xf]
          %v649 = vld [vmem:[%s332 + $0x10] sm:$0xf]
          %v650 = vld [vmem:[%s332 + $0x14] sm:$0xf]
          %v651 = vld [vmem:[%s332 + $0x18] sm:$0xf]
          %v652 = vld [vmem:[%s332 + $0x1c] sm:$0xf]
          %v653 = vld [vmem:[#allocation9] sm:$0xf]
          %v654 = vld [vmem:[#allocation9 + $0x4] sm:$0xf]
          %v655 = vld [vmem:[#allocation9 + $0x8] sm:$0xf]
          %v656 = vld [vmem:[#allocation9 + $0xc] sm:$0xf]
          %v657 = vld [vmem:[#allocation9 + $0x10] sm:$0xf]
          %v658 = vld [vmem:[#allocation9 + $0x14] sm:$0xf]
          %v659 = vld [vmem:[#allocation9 + $0x18] sm:$0xf]
          %v660 = vld [vmem:[#allocation9 + $0x1c] sm:$0xf]
          %v661 = vld [vmem:[#allocation9 + $0x20] sm:$0xf]
          %v662 = vld [vmem:[#allocation9 + $0x24] sm:$0xf]
          %v663 = vld [vmem:[#allocation9 + $0x28] sm:$0xf]
          %v664 = vld [vmem:[#allocation9 + $0x2c] sm:$0xf]
          %v665 = vld [vmem:[#allocation9 + $0x30] sm:$0xf]
          %v666 = vld [vmem:[#allocation9 + $0x34] sm:$0xf]
          %v667 = vld [vmem:[#allocation9 + $0x38] sm:$0xf]
          %v668 = vld [vmem:[#allocation9 + $0x3c] sm:$0xf]
          %v669 = vld [vmem:[#allocation10] sm:$0xf]
          %v670 = vld [vmem:[#allocation10 + $0x4] sm:$0xf]
          %v671 = vld [vmem:[#allocation10 + $0x8] sm:$0xf]
          %v672 = vld [vmem:[#allocation10 + $0xc] sm:$0xf]
          %v673 = vld [vmem:[#allocation10 + $0x10] sm:$0xf]
          %v674 = vld [vmem:[#allocation10 + $0x14] sm:$0xf]
          %v675 = vld [vmem:[#allocation10 + $0x18] sm:$0xf]
          %v676 = vld [vmem:[#allocation10 + $0x1c] sm:$0xf]
          %v677 = vld [vmem:[#allocation10 + $0x20] sm:$0xf]
          %v678 = vld [vmem:[#allocation10 + $0x24] sm:$0xf]
          %v679 = vld [vmem:[#allocation10 + $0x28] sm:$0xf]
          %v680 = vld [vmem:[#allocation10 + $0x2c] sm:$0xf]
          %v681 = vld [vmem:[#allocation10 + $0x30] sm:$0xf]
          %v682 = vld [vmem:[#allocation10 + $0x34] sm:$0xf]
          %v683 = vld [vmem:[#allocation10 + $0x38] sm:$0xf]
          %v684 = vld [vmem:[#allocation10 + $0x3c] sm:$0xf]
          %v701 = vunpack.c.l.b16 %v669
          %v702 = vunpack.c.l.b16 %v670
          %v703 = vunpack.c.l.b16 %v671
          %v704 = vunpack.c.l.b16 %v672
          %v705 = vunpack.c.l.b16 %v673
          %v706 = vunpack.c.l.b16 %v674
          %v707 = vunpack.c.l.b16 %v675
          %v708 = vunpack.c.l.b16 %v676
          %v709 = vunpack.c.l.b16 %v677
          %v710 = vunpack.c.l.b16 %v678
          %v711 = vunpack.c.l.b16 %v679
          %v712 = vunpack.c.l.b16 %v680
          %v713 = vunpack.c.l.b16 %v681
          %v714 = vunpack.c.l.b16 %v682
          %v715 = vunpack.c.l.b16 %v683
          %v716 = vunpack.c.l.b16 %v684
          %v717 = vpack.c.b16 %v702, %v701
          %v718 = vpack.c.b16 %v704, %v703
          %v719 = vpack.c.b16 %v706, %v705
          %v720 = vpack.c.b16 %v708, %v707
          %v721 = vpack.c.b16 %v710, %v709
          %v722 = vpack.c.b16 %v712, %v711
          %v723 = vpack.c.b16 %v714, %v713
          %v724 = vpack.c.b16 %v716, %v715
          %733 = vmatprep.subr.bf16.mxu0 0
          %734 = vmatpush1.bf16.msra.mxu0 %v717
          %735 = vmatprep.subr.bf16.mxu0 0
          %736 = vmatpush1.bf16.msra.mxu0 %v718
          %737 = vmatprep.subr.bf16.mxu0 0
          %738 = vmatpush1.bf16.msra.mxu0 %v719
          %739 = vmatprep.subr.bf16.mxu0 0
          %740 = vmatpush1.bf16.msra.mxu0 %v720
          %741 = vmatprep.subr.bf16.mxu0 0
          %742 = vmatpush1.bf16.msra.mxu0 %v721
          %743 = vmatprep.subr.bf16.mxu0 0
          %744 = vmatpush1.bf16.msra.mxu0 %v722
          %745 = vmatprep.subr.bf16.mxu0 0
          %746 = vmatpush1.bf16.msra.mxu0 %v723
          %747 = vmatprep.subr.bf16.mxu0 0
          %748 = vmatpush1.bf16.msra.mxu0 %v724
          %749 = vmatprep.subr.bf16.mxu0 0
          %750 = vmatpush1.bf16.msra.mxu0 0
          %751 = vmatprep.subr.bf16.mxu0 0
          %752 = vmatpush1.bf16.msra.mxu0 0
          %753 = vmatprep.subr.bf16.mxu0 0
          %754 = vmatpush1.bf16.msra.mxu0 0
          %755 = vmatprep.subr.bf16.mxu0 0
          %756 = vmatpush1.bf16.msra.mxu0 0
          %757 = vmatprep.subr.bf16.mxu0 0
          %758 = vmatpush1.bf16.msra.mxu0 0
          %759 = vmatprep.subr.bf16.mxu0 0
          %760 = vmatpush1.bf16.msra.mxu0 0
          %761 = vmatprep.subr.bf16.mxu0 0
          %762 = vmatpush1.bf16.msra.mxu0 0
          %763 = vmatprep.subr.bf16.mxu0 0
          %764 = vmatpush1.bf16.msra.mxu0 0
          %765 = vmatprep.mubr.bf16.mxu0 0
          %766 = vmatmul.mubr.bf16.gmra.mrb[0].mxu0 %v641
          %v767 = vpop.f32.mrb[0].mxu0
          %v768 = vadd.f32 0.0, %v767
          %v769 = vpop.f32.mrb[0].mxu0
          %v770 = vpop.f32.mrb[0].mxu0
          %v771 = vadd.f32 0.0, %v770
          %v772 = vpop.f32.mrb[0].mxu0
          %773 = vmatprep.mubr.bf16.mxu0 0
          %774 = vmatmul.mubr.bf16.gmra.mrb[0].mxu0 %v642
          %v775 = vpop.f32.mrb[0].mxu0
          %v776 = vadd.f32 0.0, %v775
          %v777 = vpop.f32.mrb[0].mxu0
          %v778 = vpop.f32.mrb[0].mxu0
          %v779 = vadd.f32 0.0, %v778
          %v780 = vpop.f32.mrb[0].mxu0
          %781 = vmatprep.mubr.bf16.mxu0 0
          %782 = vmatmul.mubr.bf16.gmra.mrb[0].mxu0 %v643
          %v783 = vpop.f32.mrb[0].mxu0
          %v784 = vadd.f32 0.0, %v783
          %v785 = vpop.f32.mrb[0].mxu0
          %v786 = vpop.f32.mrb[0].mxu0
          %v787 = vadd.f32 0.0, %v786
          %v788 = vpop.f32.mrb[0].mxu0
          %789 = vmatprep.mubr.bf16.mxu0 0
          %790 = vmatmul.mubr.bf16.gmra.mrb[0].mxu0 %v644
          %v791 = vpop.f32.mrb[0].mxu0
          %v792 = vadd.f32 0.0, %v791
          %v793 = vpop.f32.mrb[0].mxu0
          %v794 = vpop.f32.mrb[0].mxu0
          %v795 = vadd.f32 0.0, %v794
          %v796 = vpop.f32.mrb[0].mxu0
          %797 = vdwg.mxu0
          %v806 = vunpack.c.l.b16 %v645
          %v807 = vunpack.c.l.b16 %v646
          %v808 = vunpack.c.l.b16 %v647
          %v809 = vunpack.c.l.b16 %v648
          %v810 = vunpack.c.l.b16 %v649
          %v811 = vunpack.c.l.b16 %v650
          %v812 = vunpack.c.l.b16 %v651
          %v813 = vunpack.c.l.b16 %v652
          %v814 = vpack.c.b16 %v807, %v806
          %v815 = vpack.c.b16 %v809, %v808
          %v816 = vpack.c.b16 %v811, %v810
          %v817 = vpack.c.b16 %v813, %v812
          %v838 = vunpack.c.l.b16 %v653
          %v839 = vunpack.c.l.b16 %v654
          %v840 = vunpack.c.l.b16 %v655
          %v841 = vunpack.c.l.b16 %v656
          %v842 = vunpack.c.l.b16 %v657
          %v843 = vunpack.c.l.b16 %v658
          %v844 = vunpack.c.l.b16 %v659
          %v845 = vunpack.c.l.b16 %v660
          %v846 = vunpack.c.l.b16 %v661
          %v847 = vunpack.c.l.b16 %v662
          %v848 = vunpack.c.l.b16 %v663
          %v849 = vunpack.c.l.b16 %v664
          %v850 = vunpack.c.l.b16 %v665
          %v851 = vunpack.c.l.b16 %v666
          %v852 = vunpack.c.l.b16 %v667
          %v853 = vunpack.c.l.b16 %v668
          %v854 = vpack.c.b16 %v839, %v838
          %v855 = vpack.c.b16 %v841, %v840
          %v856 = vpack.c.b16 %v843, %v842
          %v857 = vpack.c.b16 %v845, %v844
          %v858 = vpack.c.b16 %v847, %v846
          %v859 = vpack.c.b16 %v849, %v848
          %v860 = vpack.c.b16 %v851, %v850
          %v861 = vpack.c.b16 %v853, %v852
          %870 = vmatprep.subr.bf16.mxu0 0
          %871 = vmatpush1.bf16.msra.mxu0 %v854
          %872 = vmatprep.subr.bf16.mxu0 0
          %873 = vmatpush1.bf16.msra.mxu0 %v855
          %874 = vmatprep.subr.bf16.mxu0 0
          %875 = vmatpush1.bf16.msra.mxu0 %v856
          %876 = vmatprep.subr.bf16.mxu0 0
          %877 = vmatpush1.bf16.msra.mxu0 %v857
          %878 = vmatprep.subr.bf16.mxu0 0
          %879 = vmatpush1.bf16.msra.mxu0 %v858
          %880 = vmatprep.subr.bf16.mxu0 0
          %881 = vmatpush1.bf16.msra.mxu0 %v859
          %882 = vmatprep.subr.bf16.mxu0 0
          %883 = vmatpush1.bf16.msra.mxu0 %v860
          %884 = vmatprep.subr.bf16.mxu0 0
          %885 = vmatpush1.bf16.msra.mxu0 %v861
          %886 = vmatprep.subr.bf16.mxu0 0
          %887 = vmatpush1.bf16.msra.mxu0 0
          %888 = vmatprep.subr.bf16.mxu0 0
          %889 = vmatpush1.bf16.msra.mxu0 0
          %890 = vmatprep.subr.bf16.mxu0 0
          %891 = vmatpush1.bf16.msra.mxu0 0
          %892 = vmatprep.subr.bf16.mxu0 0
          %893 = vmatpush1.bf16.msra.mxu0 0
          %894 = vmatprep.subr.bf16.mxu0 0
          %895 = vmatpush1.bf16.msra.mxu0 0
          %896 = vmatprep.subr.bf16.mxu0 0
          %897 = vmatpush1.bf16.msra.mxu0 0
          %898 = vmatprep.subr.bf16.mxu0 0
          %899 = vmatpush1.bf16.msra.mxu0 0
          %900 = vmatprep.subr.bf16.mxu0 0
          %901 = vmatpush1.bf16.msra.mxu0 0
          %902 = vmatprep.mubr.bf16.mxu0 0
          %903 = vmatmul.mubr.bf16.gmra.mrb[0].mxu0 %v814
          %v904 = vpop.f32.mrb[0].mxu0
          %v905 = vadd.f32 %v768, %v904
          %v906 = vpop.f32.mrb[0].mxu0
          %v907 = vpop.f32.mrb[0].mxu0
          %v908 = vadd.f32 %v771, %v907
          %v909 = vpop.f32.mrb[0].mxu0
          %910 = vmatprep.mubr.bf16.mxu0 0
          %911 = vmatmul.mubr.bf16.gmra.mrb[0].mxu0 %v815
          %v912 = vpop.f32.mrb[0].mxu0
          %v913 = vadd.f32 %v776, %v912
          %v914 = vpop.f32.mrb[0].mxu0
          %v915 = vpop.f32.mrb[0].mxu0
          %v916 = vadd.f32 %v779, %v915
          %v917 = vpop.f32.mrb[0].mxu0
          %918 = vmatprep.mubr.bf16.mxu0 0
          %919 = vmatmul.mubr.bf16.gmra.mrb[0].mxu0 %v816
          %v920 = vpop.f32.mrb[0].mxu0
          %v921 = vadd.f32 %v784, %v920
          %v922 = vpop.f32.mrb[0].mxu0
          %v923 = vpop.f32.mrb[0].mxu0
          %v924 = vadd.f32 %v787, %v923
          %v925 = vpop.f32.mrb[0].mxu0
          %926 = vmatprep.mubr.bf16.mxu0 0
          %927 = vmatmul.mubr.bf16.gmra.mrb[0].mxu0 %v817
          %v928 = vpop.f32.mrb[0].mxu0
          %v929 = vadd.f32 %v792, %v928
          %v930 = vpop.f32.mrb[0].mxu0
          %v931 = vpop.f32.mrb[0].mxu0
          %v932 = vadd.f32 %v795, %v931
          %v933 = vpop.f32.mrb[0].mxu0
          %934 = vdwg.mxu0
          %v935 = vld [vmem:[%s5] sm:$0x1]
          %v937 = vlaneseq
          %v938 = vshrl.u32 %v937, 7
          %v939 = vsub.s32 0, %v938
          %v940 = vrot.slane %v935, %v939
          %v942 = vadd.f32 %v905, %v940
          %v943 = vadd.f32 %v908, %v940
          %v944 = vadd.f32 %v913, %v940
          %v945 = vadd.f32 %v916, %v940
          %v946 = vadd.f32 %v921, %v940
          %v947 = vadd.f32 %v924, %v940
          %v948 = vadd.f32 %v929, %v940
          %v949 = vadd.f32 %v932, %v940
          %v950 = vmax.f32 %v942, 0.0
          %v951 = vmax.f32 %v943, 0.0
          %v952 = vmax.f32 %v944, 0.0
          %v953 = vmax.f32 %v945, 0.0
          %v954 = vmax.f32 %v946, 0.0
          %v955 = vmax.f32 %v947, 0.0
          %v956 = vmax.f32 %v948, 0.0
          %v957 = vmax.f32 %v949, 0.0
          %958 = vst [vmem:[%s373] sm:$0xff] %v950
          %959 = vst [vmem:[%s373 + $0x8] sm:$0xff] %v951
          %960 = vst [vmem:[%s373 + $0x10] sm:$0xff] %v952
          %961 = vst [vmem:[%s373 + $0x18] sm:$0xff] %v953
          %962 = vst [vmem:[%s373 + $0x20] sm:$0xff] %v954
          %963 = vst [vmem:[%s373 + $0x28] sm:$0xff] %v955
          %964 = vst [vmem:[%s373 + $0x30] sm:$0xff] %v956
          %965 = vst [vmem:[%s373 + $0x38] sm:$0xff] %v957
        $region72: #{tpu_custom_call.1} parent=43 // pred_fallthru
          _
        %s966 = sand.u32 %s188, 1
        %s967 = scalar_lea.sflag [#allocation5], %s966
        %s968 = sand.u32 %s188, 1
        %s969 = smul.addr %s968, 64
        %s970 = scalar_lea.vmem [#allocation12], %s969
        // Predicated region
        $region73: #{tpu_custom_call.1} parent=43 // pred_check
          %p971 = pneg %p198
        $region74: #{tpu_custom_call.1} parent=43 // pred_check_branch
          %973 = sbr.rel (%p971) target = $region76
        $region75: #{tpu_custom_call.1} parent=43 // pred_region
          %s974 = smul.u32 8, %s29
          %s976 = ssub.s32 1024, 1024
          %977 = vsyncadd %s967, %s976
          %s978 = smul.addr %s974, 128
          %s979 = scalar_lea.hbm %s6, %s978
          %s980 = sshll.u32 %s970, 4
          %s981 = int_to_ptr.vmem [resolvable:$true] %s980
          %986 = dma.vmem_to_hbm [thread:$0]  %s981, 1024, %s979, %s967, 128, 128, 8
        $region76: #{tpu_custom_call.1} parent=43 // pred_fallthru
          _
      $region44: #{tpu_custom_call.1} parent=5 // pred_fallthru
        _
      %p987 = scmp.le.s32.totalorder 2, %s20
      // Predicated region
      $region77: #{tpu_custom_call.1} parent=5 // pred_check
        %p988 = pneg %p987
      $region78: #{tpu_custom_call.1} parent=5 // pred_check_branch
        %990 = sbr.rel (%p988) target = $region80
      $region79: #{tpu_custom_call.1} parent=5 // pred_region
        %s991 = ssub.s32 %s20, 2
        // Predicated region
        $region81: #{tpu_custom_call.1} parent=79 // pred_check
          %p992 = pneg %p204
        $region82: #{tpu_custom_call.1} parent=79 // pred_check_branch
          %994 = sbr.rel (%p992) target = $region84
        $region83: #{tpu_custom_call.1} parent=79 // pred_region
          %s995 = sand.u32 %s189, 1
          %s996 = scalar_lea.sflag [#allocation5], %s995
          %s997 = sand.u32 %s189, 1
          %s998 = smul.addr %s997, 64
          %s999 = scalar_lea.vmem [#allocation12], %s998
          %1000 = dma.done %s996, 1024
        $region84: #{tpu_custom_call.1} parent=79 // pred_fallthru
          _
      $region80: #{tpu_custom_call.1} parent=5 // pred_fallthru
        _
    $region6: #{tpu_custom_call.1} parent=1 // loop_footer
      %s24 = sadd.s32 1, %s20
    $region7: #{tpu_custom_call.1} parent=1 // loop_footer_branch
      %19 = sbr.rel target = $region3
    $region8: #{tpu_custom_call.1} parent=1 // loop_exit
      _
    %1001 = vsyncpa [#allocation4], 1
    %s1002 = scalar_lea.sflag [#allocation4], 1
    %1003 = vsyncpa %s1002, 1
    %1004 = vsyncpa [#allocation7], 1
    %1005 = vsyncpa [#allocation11], 1
    %1006 = vsyncpa [#allocation5], 1
    %s1007 = scalar_lea.sflag [#allocation5], 1
    %1008 = vsyncpa %s1007, 1

// kernel: tpu_custom_call.1
$region0: #{tpu_custom_call.1}
  #allocation0 [shape = 'u32[]', space=smem, size = 0x4, offset = 0x4, fixed_abs, tag = 'smem constant byte address 0x4 - core index']
  #allocation1 [shape = 'u32[144,128]{1,0:T(1,128)}', space=vmem, size = 0x12000, scoped, tag = 'internal scratch']
  #allocation2 [shape = 'f32[64,128]{1,0:T(8,128)}', space=vmem, size = 0x8000, scoped, tag = 'scratch operand']
  %s0 = inlined_call_operand.hbm [shape: s8[128,128], index: 0, kind: input, shape index: {}]
  %s1 = inlined_call_operand.hbm [shape: bf16[128,128], index: 1, kind: input, shape index: {}]
  %s2 = inlined_call_operand.hbm [shape: bf16[128,128], index: 2, kind: input, shape index: {}]
  %s3 = inlined_call_operand.hbm [shape: bf16[128,128], index: 3, kind: input, shape index: {}]
  %s4 = inlined_call_operand.hbm [shape: bf16[128,128], index: 4, kind: input, shape index: {}]
  %s5 = inlined_call_operand.vmem [shape: f32[1,128], index: 5, kind: input, shape index: {}]
  %s6 = inlined_call_operand.hbm [shape: f32[128,128], index: 6, kind: output, shape index: {}]
  %s7 = sld [smem:[#allocation0]]
  $region85: #{tpu_custom_call.1} parent=0
    _
  %s9 = ssub.s32 1, %s7
  %s10 = scalar_select 0, %s9, %s7
  $region1: #{tpu_custom_call.1} parent=0
    #allocation3 [shape = 'u8[16384]{0}', space=vmem, size = 0x4000, scoped, tag = 'input window, operand 0']
    #allocation4 [shape = 's32[2]{0}', space=sflag, size = 0x8, scoped, tag = 'scoped memory for tpu_custom_call.1']
    #allocation5 [shape = 's32[2]{0}', space=sflag, size = 0x8, scoped, tag = 'scoped memory for tpu_custom_call.1']
    #allocation6 [shape = 'u8[32768]{0}', space=vmem, size = 0x8000, scoped, tag = 'input window, operand 1, single buffered']
    #allocation7 [shape = 's32[1]{0}', space=sflag, size = 0x4, scoped, tag = 'scoped memory for tpu_custom_call.1']
    #allocation8 [shape = 'u8[32768]{0}', space=vmem, size = 0x8000, scoped, tag = 'input window, operand 2']
    #allocation9 [shape = 'u8[32768]{0}', space=vmem, size = 0x8000, scoped, tag = 'input window, operand 3, single buffered']
    #allocation10 [shape = 'u8[32768]{0}', space=vmem, size = 0x8000, scoped, tag = 'input window, operand 4, single buffered']
    #allocation11 [shape = 's32[1]{0}', space=sflag, size = 0x4, scoped, tag = 'scoped memory for tpu_custom_call.1']
    #allocation12 [shape = 'u8[65536]{0}', space=vmem, size = 0x10000, scoped, tag = 'output window, operand 0']
    %11 = vsyncpa [#allocation4], 0
    %s12 = scalar_lea.sflag [#allocation4], 1
    %13 = vsyncpa %s12, 0
    %14 = vsyncpa [#allocation7], 0
    %15 = vsyncpa [#allocation11], 0
    %16 = vsyncpa [#allocation5], 0
    %s17 = scalar_lea.sflag [#allocation5], 1
    %18 = vsyncpa %s17, 0
    loop: start=0, step=1, limit=4
    $region2: #{tpu_custom_call.1} parent=1 // loop_pre_header
      _
    $region3: #{tpu_custom_call.1} parent=1 // loop_header
      %s20 = sphi 0, %s24
      %p21 = scmp.ge.s32.totalorder %s20, 4
      %s27 = sphi 0, %s39
      %s28 = sphi 0, %s35
      %s29 = sphi 0, %s27
      %s30 = sphi 0, %s28
      %s31 = sphi 0, %s29
      %s32 = sphi 0, %s30
      %s44 = sphi 0, %s46
      %s47 = sphi 0, %s44
      %s48 = sphi 0, %s47
      %s64 = sphi 0, %s48
      %s70 = sphi 0, %s72
      %s73 = sphi 0, %s70
      %s74 = sphi 0, %s73
      %s90 = sphi 0, %s74
      %s96 = sphi 0, %s98
      %s99 = sphi 0, %s96
      %s100 = sphi 0, %s99
      %s116 = sphi 0, %s100
      %s120 = sphi 0, %s120
      %s122 = sphi 0, %s120
      %s123 = sphi 0, %s122
      %s137 = sphi 0, %s123
      %s141 = sphi 0, %s141
      %s143 = sphi 0, %s141
      %s144 = sphi 0, %s143
      %s158 = sphi 0, %s144
      %s162 = sphi 0, %s162
      %s164 = sphi 0, %s162
      %s165 = sphi 0, %s164
      %s179 = sphi 0, %s165
      %s185 = sphi 0, %s187
      %s188 = sphi 0, %s185
      %s189 = sphi 0, %s188
      %s205 = sphi 0, %s189
    $region4: #{tpu_custom_call.1} parent=1 // loop_header_branch
      %23 = sbr.rel (%p21) target = $region8
    $region5: #{tpu_custom_call.1} parent=1 // loop_body
      %s25 = ssub.s32 %s20, 1
      %s26 = ssub.s32 %s20, 2
      %s33 = sadd.s32 1, %s28
      %p34 = scmp.ge.s32.totalorder %s33, 1
      %s35 = scalar_select %p34, 0, %s33
      %s36 = sadd.s32 1, %s27
      %s37 = scalar_select %p34, %s36, %s27
      %p38 = scmp.ge.s32.totalorder %s37, 2
      %s39 = scalar_select %p38, 0, %s37
      %s40 = ssub.s32 %s27, %s39
      %s41 = ssub.s32 %s28, %s35
      %s42 = sor.u32 %s40, %s41
      %p43 = scmp.eq.s32.totalorder %s42, 0
      %s45 = sadd.s32 %s44, 1
      %s46 = scalar_select %p43, %s44, %s45
      %p49 = pneg %p43
      %p50 = scmp.eq.s32.totalorder %s20, 1
      %p51 = por %p49, %p50
      %p52 = scmp.ne.s32.totalorder %s44, %s47
      %p53 = scmp.eq.s32.totalorder %s20, 0
      %p54 = por %p52, %p53
      %p55 = scmp.ne.s32.totalorder %s44, %s47
      %p56 = scmp.eq.s32.totalorder %s25, 1
      %p57 = por %p55, %p56
      %p58 = scmp.ne.s32.totalorder %s47, %s48
      %p59 = scmp.eq.s32.totalorder %s25, 0
      %p60 = por %p58, %p59
      %p61 = scmp.ne.s32.totalorder %s47, %s48
      %p62 = scmp.eq.s32.totalorder %s26, 1
      %p63 = por %p61, %p62
      %p65 = scmp.ne.s32.totalorder %s48, %s64
      %p66 = scmp.eq.s32.totalorder %s26, 0
      %p67 = por %p65, %p66
      %s68 = ssub.s32 %s28, %s35
      %p69 = scmp.eq.s32.totalorder %s68, 0
      %s71 = sadd.s32 %s70, 1
      %s72 = scalar_select %p69, %s70, %s71
      %p75 = pneg %p69
      %p76 = scmp.eq.s32.totalorder %s20, 1
      %p77 = por %p75, %p76
      %p78 = scmp.ne.s32.totalorder %s70, %s73
      %p79 = scmp.eq.s32.totalorder %s20, 0
      %p80 = por %p78, %p79
      %p81 = scmp.ne.s32.totalorder %s70, %s73
      %p82 = scmp.eq.s32.totalorder %s25, 1
      %p83 = por %p81, %p82
      %p84 = scmp.ne.s32.totalorder %s73, %s74
      %p85 = scmp.eq.s32.totalorder %s25, 0
      %p86 = por %p84, %p85
      %p87 = scmp.ne.s32.totalorder %s73, %s74
      %p88 = scmp.eq.s32.totalorder %s26, 1
      %p89 = por %p87, %p88
      %p91 = scmp.ne.s32.totalorder %s74, %s90
      %p92 = scmp.eq.s32.totalorder %s26, 0
      %p93 = por %p91, %p92
      %s94 = ssub.s32 %s27, %s39
      %p95 = scmp.eq.s32.totalorder %s94, 0
      %s97 = sadd.s32 %s96, 1
      %s98 = scalar_select %p95, %s96, %s97
      %p101 = pneg %p95
      %p102 = scmp.eq.s32.totalorder %s20, 1
      %p103 = por %p101, %p102
      %p104 = scmp.ne.s32.totalorder %s96, %s99
      %p105 = scmp.eq.s32.totalorder %s20, 0
      %p106 = por %p104, %p105
      %p107 = scmp.ne.s32.totalorder %s96, %s99
      %p108 = scmp.eq.s32.totalorder %s25, 1
      %p109 = por %p107, %p108
      %p110 = scmp.ne.s32.totalorder %s99, %s100
      %p111 = scmp.eq.s32.totalorder %s25, 0
      %p112 = por %p110, %p111
      %p113 = scmp.ne.s32.totalorder %s99, %s100
      %p114 = scmp.eq.s32.totalorder %s26, 1
      %p115 = por %p113, %p114
      %p117 = scmp.ne.s32.totalorder %s100, %s116
      %p118 = scmp.eq.s32.totalorder %s26, 0
      %p119 = por %p117, %p118
      %s121 = sadd.s32 %s120, 1
      %p124 = scmp.eq.s32.totalorder %s20, 1
      %p125 = scmp.ne.s32.totalorder %s120, %s122
      %p126 = scmp.eq.s32.totalorder %s20, 0
      %p127 = por %p125, %p126
      %p128 = scmp.ne.s32.totalorder %s120, %s122
      %p129 = scmp.eq.s32.totalorder %s25, 1
      %p130 = por %p128, %p129
      %p131 = scmp.ne.s32.totalorder %s122, %s123
      %p132 = scmp.eq.s32.totalorder %s25, 0
      %p133 = por %p131, %p132
      %p134 = scmp.ne.s32.totalorder %s122, %s123
      %p135 = scmp.eq.s32.totalorder %s26, 1
      %p136 = por %p134, %p135
      %p138 = scmp.ne.s32.totalorder %s123, %s137
      %p139 = scmp.eq.s32.totalorder %s26, 0
      %p140 = por %p138, %p139
      %s142 = sadd.s32 %s141, 1
      %p145 = scmp.eq.s32.totalorder %s20, 1
      %p146 = scmp.ne.s32.totalorder %s141, %s143
      %p147 = scmp.eq.s32.totalorder %s20, 0
      %p148 = por %p146, %p147
      %p149 = scmp.ne.s32.totalorder %s141, %s143
      %p150 = scmp.eq.s32.totalorder %s25, 1
      %p151 = por %p149, %p150
      %p152 = scmp.ne.s32.totalorder %s143, %s144
      %p153 = scmp.eq.s32.totalorder %s25, 0
      %p154 = por %p152, %p153
      %p155 = scmp.ne.s32.totalorder %s143, %s144
      %p156 = scmp.eq.s32.totalorder %s26, 1
      %p157 = por %p155, %p156
      %p159 = scmp.ne.s32.totalorder %s144, %s158
      %p160 = scmp.eq.s32.totalorder %s26, 0
      %p161 = por %p159, %p160
      %s163 = sadd.s32 %s162, 1
      %p166 = scmp.eq.s32.totalorder %s20, 1
      %p167 = scmp.ne.s32.totalorder %s162, %s164
      %p168 = scmp.eq.s32.totalorder %s20, 0
      %p169 = por %p167, %p168
      %p170 = scmp.ne.s32.totalorder %s162, %s164
      %p171 = scmp.eq.s32.totalorder %s25, 1
      %p172 = por %p170, %p171
      %p173 = scmp.ne.s32.totalorder %s164, %s165
      %p174 = scmp.eq.s32.totalorder %s25, 0
      %p175 = por %p173, %p174
      %p176 = scmp.ne.s32.totalorder %s164, %s165
      %p177 = scmp.eq.s32.totalorder %s26, 1
      %p178 = por %p176, %p177
      %p180 = scmp.ne.s32.totalorder %s165, %s179
      %p181 = scmp.eq.s32.totalorder %s26, 0
      %p182 = por %p180, %p181
      %s183 = ssub.s32 %s27, %s39
      %p184 = scmp.eq.s32.totalorder %s183, 0
      %s186 = sadd.s32 %s185, 1
      %s187 = scalar_select %p184, %s185, %s186
      %p190 = pneg %p184
      %p191 = scmp.eq.s32.totalorder %s20, 1
      %p192 = por %p190, %p191
      %p193 = scmp.ne.s32.totalorder %s185, %s188
      %p194 = scmp.eq.s32.totalorder %s20, 0
      %p195 = por %p193, %p194
      %p196 = scmp.ne.s32.totalorder %s185, %s188
      %p197 = scmp.eq.s32.totalorder %s25, 1
      %p198 = por %p196, %p197
      %p199 = scmp.ne.s32.totalorder %s188, %s189
      %p200 = scmp.eq.s32.totalorder %s25, 0
      %p201 = por %p199, %p200
      %p202 = scmp.ne.s32.totalorder %s188, %s189
      %p203 = scmp.eq.s32.totalorder %s26, 1
      %p204 = por %p202, %p203
      %p206 = scmp.ne.s32.totalorder %s189, %s205
      %p207 = scmp.eq.s32.totalorder %s26, 0
      %p208 = por %p206, %p207
      %p209 = scmp.le.s32.totalorder 1, %s20
      %p210 = scmp.lt.s32.totalorder %s20, 3
      %p211 = pnand %p209, %p210
      %p212 = pneg %p211
      // Predicated region
      $region9: #{tpu_custom_call.1} parent=5 // pred_check
        _
      $region10: #{tpu_custom_call.1} parent=5 // pred_check_branch
        %214 = sbr.rel (%p211) target = $region12
      $region11: #{tpu_custom_call.1} parent=5 // pred_region
        %s215 = ssub.s32 %s20, 1
        // Predicated region
        $region13: #{tpu_custom_call.1} parent=11 // pred_check
          %p216 = pneg %p86
        $region14: #{tpu_custom_call.1} parent=11 // pred_check_branch
          %218 = sbr.rel (%p216) target = $region16
        $region15: #{tpu_custom_call.1} parent=11 // pred_region
          %s219 = smul.u32 16, %s30
          %s221 = ssub.s32 1024, 1024
          %222 = vsyncadd [#allocation7], %s221
          %s223 = smul.addr %s219, 64
          %s224 = scalar_lea.hbm %s1, %s223
          %s225 = sshll.u32 [#allocation6], 4
          %s226 = int_to_ptr.vmem [resolvable:$true] %s225
          %231 = dma.hbm_to_vmem [thread:$0]  %s224, 1024, %s226, [#allocation7], 64, 64, 4
        $region16: #{tpu_custom_call.1} parent=11 // pred_fallthru
          _
        // Predicated region
        $region17: #{tpu_custom_call.1} parent=11 // pred_check
          %p232 = pneg %p133
        $region18: #{tpu_custom_call.1} parent=11 // pred_check_branch
          %234 = sbr.rel (%p232) target = $region20
        $region19: #{tpu_custom_call.1} parent=11 // pred_region
          %s236 = ssub.s32 1024, 1024
          %237 = vsyncadd [#allocation7], %s236
          %s238 = sshll.u32 [#allocation9], 4
          %s239 = int_to_ptr.vmem [resolvable:$true] %s238
          %244 = dma.hbm_to_vmem [thread:$0]  %s3, 1024, %s239, [#allocation7], 64, 64, 4
        $region20: #{tpu_custom_call.1} parent=11 // pred_fallthru
          _
        // Predicated region
        $region21: #{tpu_custom_call.1} parent=11 // pred_check
          %p245 = pneg %p154
        $region22: #{tpu_custom_call.1} parent=11 // pred_check_branch
          %247 = sbr.rel (%p245) target = $region24
        $region23: #{tpu_custom_call.1} parent=11 // pred_region
          %s249 = ssub.s32 1024, 1024
          %250 = vsyncadd [#allocation11], %s249
          %s251 = sshll.u32 [#allocation10], 4
          %s252 = int_to_ptr.vmem [resolvable:$true] %s251
          %257 = dma.hbm_to_vmem [thread:$0]  %s4, 1024, %s252, [#allocation11], 64, 64, 4
        $region24: #{tpu_custom_call.1} parent=11 // pred_fallthru
          _
        // Predicated region
        $region25: #{tpu_custom_call.1} parent=11 // pred_check
          %p258 = pneg %p175
        $region26: #{tpu_custom_call.1} parent=11 // pred_check_branch
          %260 = sbr.rel (%p258) target = $region28
        $region27: #{tpu_custom_call.1} parent=11 // pred_region
          _
        $region28: #{tpu_custom_call.1} parent=11 // pred_fallthru
          _
      $region12: #{tpu_custom_call.1} parent=5 // pred_fallthru
        _
      %p261 = scmp.lt.s32.totalorder %s20, 2
      // Predicated region
      $region29: #{tpu_custom_call.1} parent=5 // pred_check
        %p262 = pneg %p261
      $region30: #{tpu_custom_call.1} parent=5 // pred_check_branch
        %264 = sbr.rel (%p262) target = $region32
      $region31: #{tpu_custom_call.1} parent=5 // pred_region
        // Predicated region
        $region33: #{tpu_custom_call.1} parent=31 // pred_check
          %p265 = pneg %p54
        $region34: #{tpu_custom_call.1} parent=31 // pred_check_branch
          %267 = sbr.rel (%p265) target = $region36
        $region35: #{tpu_custom_call.1} parent=31 // pred_region
          %s268 = sand.u32 %s20, 1
          %s269 = scalar_lea.sflag [#allocation4], %s268
          %s270 = sand.u32 %s44, 1
          %s271 = smul.addr %s270, 16
          %s272 = scalar_lea.vmem [#allocation3], %s271
          %s273 = smul.u32 2, %s27
          %s275 = ssub.s32 256, 256
          %276 = vsyncadd %s269, %s275
          %s277 = sadd.s32 %s28, %s273
          %s278 = smul.addr %s277, 128
          %s279 = scalar_lea.hbm %s0, %s278
          %s280 = sshll.u32 %s272, 4
          %s281 = int_to_ptr.vmem [resolvable:$true] %s280
          %286 = dma.hbm_to_vmem [thread:$0]  %s279, 256, %s281, %s269, 128, 128, 8
        $region36: #{tpu_custom_call.1} parent=31 // pred_fallthru
          _
        // Predicated region
        $region37: #{tpu_custom_call.1} parent=31 // pred_check
          %p287 = pneg %p106
        $region38: #{tpu_custom_call.1} parent=31 // pred_check_branch
          %289 = sbr.rel (%p287) target = $region40
        $region39: #{tpu_custom_call.1} parent=31 // pred_region
          %s290 = sand.u32 %s20, 1
          %s291 = scalar_lea.sflag [#allocation4], %s290
          %s292 = sand.u32 %s96, 1
          %s293 = smul.addr %s292, 32
          %s294 = scalar_lea.vmem [#allocation8], %s293
          %s295 = smul.u32 8, %s27
          %s297 = ssub.s32 512, 512
          %298 = vsyncadd %s291, %s297
          %s299 = smul.addr %s295, 64
          %s300 = scalar_lea.hbm %s2, %s299
          %s301 = sshll.u32 %s294, 4
          %s302 = int_to_ptr.vmem [resolvable:$true] %s301
          %307 = dma.hbm_to_vmem [thread:$0]  %s300, 512, %s302, %s291, 64, 64, 4
        $region40: #{tpu_custom_call.1} parent=31 // pred_fallthru
          _
      $region32: #{tpu_custom_call.1} parent=5 // pred_fallthru
        _
      %p308 = scmp.le.s32.totalorder 1, %s20
      %p309 = scmp.lt.s32.totalorder %s20, 3
      %p310 = pnand %p308, %p309
      %p311 = pneg %p310
      // Predicated region
      $region41: #{tpu_custom_call.1} parent=5 // pred_check
        _
      $region42: #{tpu_custom_call.1} parent=5 // pred_check_branch
        %313 = sbr.rel (%p310) target = $region44
      $region43: #{tpu_custom_call.1} parent=5 // pred_region
        %s314 = ssub.s32 %s20, 1
        %s315 = sand.u32 %s25, 1
        %s316 = scalar_lea.sflag [#allocation4], %s315
        %s317 = sand.u32 %s47, 1
        %s318 = smul.addr %s317, 16
        %s319 = scalar_lea.vmem [#allocation3], %s318
        // Predicated region
        $region45: #{tpu_custom_call.1} parent=43 // pred_check
          %p320 = pneg %p60
        $region46: #{tpu_custom_call.1} parent=43 // pred_check_branch
          %322 = sbr.rel (%p320) target = $region48
        $region47: #{tpu_custom_call.1} parent=43 // pred_region
          %323 = dma.done %s316, 256
        $region48: #{tpu_custom_call.1} parent=43 // pred_fallthru
          _
        // Predicated region
        $region49: #{tpu_custom_call.1} parent=43 // pred_check
          %p324 = pneg %p86
        $region50: #{tpu_custom_call.1} parent=43 // pred_check_branch
          %326 = sbr.rel (%p324) target = $region52
        $region51: #{tpu_custom_call.1} parent=43 // pred_region
          %327 = dma.done [#allocation7], 1024
        $region52: #{tpu_custom_call.1} parent=43 // pred_fallthru
          _
        %s328 = sand.u32 %s25, 1
        %s329 = scalar_lea.sflag [#allocation4], %s328
        %s330 = sand.u32 %s99, 1
        %s331 = smul.addr %s330, 32
        %s332 = scalar_lea.vmem [#allocation8], %s331
        // Predicated region
        $region53: #{tpu_custom_call.1} parent=43 // pred_check
          %p333 = pneg %p112
        $region54: #{tpu_custom_call.1} parent=43 // pred_check_branch
          %335 = sbr.rel (%p333) target = $region56
        $region55: #{tpu_custom_call.1} parent=43 // pred_region
          %336 = dma.done %s329, 512
        $region56: #{tpu_custom_call.1} parent=43 // pred_fallthru
          _
        // Predicated region
        $region57: #{tpu_custom_call.1} parent=43 // pred_check
          %p337 = pneg %p133
        $region58: #{tpu_custom_call.1} parent=43 // pred_check_branch
          %339 = sbr.rel (%p337) target = $region60
        $region59: #{tpu_custom_call.1} parent=43 // pred_region
          %340 = dma.done [#allocation7], 1024
        $region60: #{tpu_custom_call.1} parent=43 // pred_fallthru
          _
        // Predicated region
        $region61: #{tpu_custom_call.1} parent=43 // pred_check
          %p341 = pneg %p154
        $region62: #{tpu_custom_call.1} parent=43 // pred_check_branch
          %343 = sbr.rel (%p341) target = $region64
        $region63: #{tpu_custom_call.1} parent=43 // pred_region
          %344 = dma.done [#allocation11], 1024
        $region64: #{tpu_custom_call.1} parent=43 // pred_fallthru
          _
        %s345 = sand.u32 %s25, 1
        %s346 = scalar_lea.sflag [#allocation4], %s345
        %s347 = sand.u32 %s47, 1
        %s348 = smul.addr %s347, 16
        %s349 = scalar_lea.vmem [#allocation3], %s348
        %p350 = pneg %p60
        %p351 = pneg %p57
        %p352 = pneg %p86
        %p353 = pneg %p83
        %s354 = sand.u32 %s25, 1
        %s355 = scalar_lea.sflag [#allocation4], %s354
        %s356 = sand.u32 %s99, 1
        %s357 = smul.addr %s356, 32
        %s358 = scalar_lea.vmem [#allocation8], %s357
        %p359 = pneg %p112
        %p360 = pneg %p109
        %p361 = pneg %p133
        %p362 = pneg %p130
        %p363 = pneg %p154
        %p364 = pneg %p151
        %p365 = pneg %p175
        %p366 = pneg %p172
        %p367 = pneg %p201
        %p368 = pneg %p198
        %s369 = sand.u32 %s188, 1
        %s370 = scalar_lea.sflag [#allocation5], %s369
        %s371 = sand.u32 %s188, 1
        %s372 = smul.addr %s371, 64
        %s373 = scalar_lea.vmem [#allocation12], %s372
        %s374 = smul.u32 2, %s29
        %s375 = smul.u32 16, %s30
        %s376 = smul.u32 8, %s29
        %s377 = smul.u32 8, %s29
        %p379 = scmp.eq.s32.totalorder %s30, 0
        // Predicated region
        $region65: #{tpu_custom_call.1} parent=43 // pred_check
          %p380 = pneg %p379
        $region66: #{tpu_custom_call.1} parent=43 // pred_check_branch
          %382 = sbr.rel (%p380) target = $region68
        $region67: #{tpu_custom_call.1} parent=43 // pred_region
          %383 = vst [vmem:[#allocation2] sm:$0xff] 0.0
          %384 = vst [vmem:[#allocation2 + $0x8] sm:$0xff] 0.0
          %385 = vst [vmem:[#allocation2 + $0x10] sm:$0xff] 0.0
          %386 = vst [vmem:[#allocation2 + $0x18] sm:$0xff] 0.0
          %387 = vst [vmem:[#allocation2 + $0x20] sm:$0xff] 0.0
          %388 = vst [vmem:[#allocation2 + $0x28] sm:$0xff] 0.0
          %389 = vst [vmem:[#allocation2 + $0x30] sm:$0xff] 0.0
          %390 = vst [vmem:[#allocation2 + $0x38] sm:$0xff] 0.0
        $region68: #{tpu_custom_call.1} parent=43 // pred_fallthru
          _
        %v391 = vld [vmem:[%s319] sm:$0xff]
        %v392 = vld [vmem:[%s319 + $0x8] sm:$0xff]
        %v393 = vunpack.c.l.s8.bf16 %v391
        %v394 = vunpack.c.h.s8.bf16 %v391
        %v395 = vunpack.c.l.s8.bf16 %v392
        %v396 = vunpack.c.h.s8.bf16 %v392
        %v397 = vld [vmem:[#allocation2] sm:$0xff]
        %v398 = vld [vmem:[#allocation2 + $0x8] sm:$0xff]
        %v399 = vld [vmem:[#allocation2 + $0x10] sm:$0xff]
        %v400 = vld [vmem:[#allocation2 + $0x18] sm:$0xff]
        %v401 = vld [vmem:[#allocation2 + $0x20] sm:$0xff]
        %v402 = vld [vmem:[#allocation2 + $0x28] sm:$0xff]
        %v403 = vld [vmem:[#allocation2 + $0x30] sm:$0xff]
        %v404 = vld [vmem:[#allocation2 + $0x38] sm:$0xff]
        %v405 = vld [vmem:[#allocation6] sm:$0xf]
        %v406 = vld [vmem:[#allocation6 + $0x4] sm:$0xf]
        %v407 = vld [vmem:[#allocation6 + $0x8] sm:$0xf]
        %v408 = vld [vmem:[#allocation6 + $0xc] sm:$0xf]
        %v409 = vld [vmem:[#allocation6 + $0x10] sm:$0xf]
        %v410 = vld [vmem:[#allocation6 + $0x14] sm:$0xf]
        %v411 = vld [vmem:[#allocation6 + $0x18] sm:$0xf]
        %v412 = vld [vmem:[#allocation6 + $0x1c] sm:$0xf]
        %v413 = vld [vmem:[#allocation6 + $0x20] sm:$0xf]
        %v414 = vld [vmem:[#allocation6 + $0x24] sm:$0xf]
        %v415 = vld [vmem:[#allocation6 + $0x28] sm:$0xf]
        %v416 = vld [vmem:[#allocation6 + $0x2c] sm:$0xf]
        %v417 = vld [vmem:[#allocation6 + $0x30] sm:$0xf]
        %v418 = vld [vmem:[#allocation6 + $0x34] sm:$0xf]
        %v419 = vld [vmem:[#allocation6 + $0x38] sm:$0xf]
        %v420 = vld [vmem:[#allocation6 + $0x3c] sm:$0xf]
        %v437 = vunpack.c.l.b16 %v405
        %v438 = vunpack.c.l.b16 %v406
        %v439 = vunpack.c.l.b16 %v407
        %v440 = vunpack.c.l.b16 %v408
        %v441 = vunpack.c.l.b16 %v409
        %v442 = vunpack.c.l.b16 %v410
        %v443 = vunpack.c.l.b16 %v411
        %v444 = vunpack.c.l.b16 %v412
        %v445 = vunpack.c.l.b16 %v413
        %v446 = vunpack.c.l.b16 %v414
        %v447 = vunpack.c.l.b16 %v415
        %v448 = vunpack.c.l.b16 %v416
        %v449 = vunpack.c.l.b16 %v417
        %v450 = vunpack.c.l.b16 %v418
        %v451 = vunpack.c.l.b16 %v419
        %v452 = vunpack.c.l.b16 %v420
        %v453 = vpack.c.b16 %v438, %v437
        %v454 = vpack.c.b16 %v440, %v439
        %v455 = vpack.c.b16 %v442, %v441
        %v456 = vpack.c.b16 %v444, %v443
        %v457 = vpack.c.b16 %v446, %v445
        %v458 = vpack.c.b16 %v448, %v447
        %v459 = vpack.c.b16 %v450, %v449
        %v460 = vpack.c.b16 %v452, %v451
        %469 = vmatprep.subr.bf16.mxu0 0
        %470 = vmatpush1.bf16.msra.mxu0 %v453
        %471 = vmatprep.subr.bf16.mxu0 0
        %472 = vmatpush1.bf16.msra.mxu0 %v454
        %473 = vmatprep.subr.bf16.mxu0 0
        %474 = vmatpush1.bf16.msra.mxu0 %v455
        %475 = vmatprep.subr.bf16.mxu0 0
        %476 = vmatpush1.bf16.msra.mxu0 %v456
        %477 = vmatprep.subr.bf16.mxu0 0
        %478 = vmatpush1.bf16.msra.mxu0 %v457
        %479 = vmatprep.subr.bf16.mxu0 0
        %480 = vmatpush1.bf16.msra.mxu0 %v458
        %481 = vmatprep.subr.bf16.mxu0 0
        %482 = vmatpush1.bf16.msra.mxu0 %v459
        %483 = vmatprep.subr.bf16.mxu0 0
        %484 = vmatpush1.bf16.msra.mxu0 %v460
        %485 = vmatprep.subr.bf16.mxu0 0
        %486 = vmatpush1.bf16.msra.mxu0 0
        %487 = vmatprep.subr.bf16.mxu0 0
        %488 = vmatpush1.bf16.msra.mxu0 0
        %489 = vmatprep.subr.bf16.mxu0 0
        %490 = vmatpush1.bf16.msra.mxu0 0
        %491 = vmatprep.subr.bf16.mxu0 0
        %492 = vmatpush1.bf16.msra.mxu0 0
        %493 = vmatprep.subr.bf16.mxu0 0
        %494 = vmatpush1.bf16.msra.mxu0 0
        %495 = vmatprep.subr.bf16.mxu0 0
        %496 = vmatpush1.bf16.msra.mxu0 0
        %497 = vmatprep.subr.bf16.mxu0 0
        %498 = vmatpush1.bf16.msra.mxu0 0
        %499 = vmatprep.subr.bf16.mxu0 0
        %500 = vmatpush1.bf16.msra.mxu0 0
        %501 = vmatprep.mubr.bf16.mxu0 0
        %502 = vmatmul.mubr.bf16.gmra.mrb[0].mxu0 %v393
        %v503 = vpop.f32.mrb[0].mxu0
        %v504 = vadd.f32 0.0, %v503
        %v505 = vpop.f32.mrb[0].mxu0
        %v506 = vpop.f32.mrb[0].mxu0
        %v507 = vadd.f32 0.0, %v506
        %v508 = vpop.f32.mrb[0].mxu0
        %509 = vmatprep.mubr.bf16.mxu0 0
        %510 = vmatmul.mubr.bf16.gmra.mrb[0].mxu0 %v394
        %v511 = vpop.f32.mrb[0].mxu0
        %v512 = vadd.f32 0.0, %v511
        %v513 = vpop.f32.mrb[0].mxu0
        %v514 = vpop.f32.mrb[0].mxu0
        %v515 = vadd.f32 0.0, %v514
        %v516 = vpop.f32.mrb[0].mxu0
        %517 = vmatprep.mubr.bf16.mxu0 0
        %518 = vmatmul.mubr.bf16.gmra.mrb[0].mxu0 %v395
        %v519 = vpop.f32.mrb[0].mxu0
        %v520 = vadd.f32 0.0, %v519
        %v521 = vpop.f32.mrb[0].mxu0
        %v522 = vpop.f32.mrb[0].mxu0
        %v523 = vadd.f32 0.0, %v522
        %v524 = vpop.f32.mrb[0].mxu0
        %525 = vmatprep.mubr.bf16.mxu0 0
        %526 = vmatmul.mubr.bf16.gmra.mrb[0].mxu0 %v396
        %v527 = vpop.f32.mrb[0].mxu0
        %v528 = vadd.f32 0.0, %v527
        %v529 = vpop.f32.mrb[0].mxu0
        %v530 = vpop.f32.mrb[0].mxu0
        %v531 = vadd.f32 0.0, %v530
        %v532 = vpop.f32.mrb[0].mxu0
        %533 = vdwg.mxu0
        %v534 = vadd.f32 %v397, %v504
        %v535 = vadd.f32 %v398, %v507
        %v536 = vadd.f32 %v399, %v512
        %v537 = vadd.f32 %v400, %v515
        %v538 = vadd.f32 %v401, %v520
        %v539 = vadd.f32 %v402, %v523
        %v540 = vadd.f32 %v403, %v528
        %v541 = vadd.f32 %v404, %v531
        %542 = vst [vmem:[#allocation2] sm:$0xff] %v534
        %543 = vst [vmem:[#allocation2 + $0x8] sm:$0xff] %v535
        %544 = vst [vmem:[#allocation2 + $0x10] sm:$0xff] %v536
        %545 = vst [vmem:[#allocation2 + $0x18] sm:$0xff] %v537
        %546 = vst [vmem:[#allocation2 + $0x20] sm:$0xff] %v538
        %547 = vst [vmem:[#allocation2 + $0x28] sm:$0xff] %v539
        %548 = vst [vmem:[#allocation2 + $0x30] sm:$0xff] %v540
        %549 = vst [vmem:[#allocation2 + $0x38] sm:$0xff] %v541
        // Predicated region
        $region69: #{tpu_custom_call.1} parent=43 // pred_check
          %p550 = pneg %p379
        $region70: #{tpu_custom_call.1} parent=43 // pred_check_branch
          %552 = sbr.rel (%p550) target = $region72
        $region71: #{tpu_custom_call.1} parent=43 // pred_region
          %v553 = vld [vmem:[#allocation2] sm:$0xff]
          %v554 = vld [vmem:[#allocation2 + $0x8] sm:$0xff]
          %v555 = vld [vmem:[#allocation2 + $0x10] sm:$0xff]
          %v556 = vld [vmem:[#allocation2 + $0x18] sm:$0xff]
          %v557 = vld [vmem:[#allocation2 + $0x20] sm:$0xff]
          %v558 = vld [vmem:[#allocation2 + $0x28] sm:$0xff]
          %v559 = vld [vmem:[#allocation2 + $0x30] sm:$0xff]
          %v560 = vld [vmem:[#allocation2 + $0x38] sm:$0xff]
          %vm561 = vcmp.gt.f32.partialorder %v553, 0.0
          %vm562 = vcmp.gt.f32.partialorder %v554, 0.0
          %vm563 = vcmp.gt.f32.partialorder %v555, 0.0
          %vm564 = vcmp.gt.f32.partialorder %v556, 0.0
          %vm565 = vcmp.gt.f32.partialorder %v557, 0.0
          %vm566 = vcmp.gt.f32.partialorder %v558, 0.0
          %vm567 = vcmp.gt.f32.partialorder %v559, 0.0
          %vm568 = vcmp.gt.f32.partialorder %v560, 0.0
          %v569 = vmax.f32 %v553, 1.0
          %v570 = vmax.f32 %v554, 1.0
          %v571 = vmax.f32 %v555, 1.0
          %v572 = vmax.f32 %v556, 1.0
          %v573 = vmax.f32 %v557, 1.0
          %v574 = vmax.f32 %v558, 1.0
          %v575 = vmax.f32 %v559, 1.0
          %v576 = vmax.f32 %v560, 1.0
          %v577 = vrcp.pop %v569
          %v578 = vrcp.pop %v570
          %v579 = vrcp.pop %v571
          %v580 = vrcp.pop %v572
          %v581 = vrcp.pop %v573
          %v582 = vrcp.pop %v574
          %v583 = vrcp.pop %v575
          %v584 = vrcp.pop %v576
          %v585 = vsel %vm561, %v577, 0.0
          %v586 = vsel %vm562, %v578, 0.0
          %v587 = vsel %vm563, %v579, 0.0
          %v588 = vsel %vm564, %v580, 0.0
          %v589 = vsel %vm565, %v581, 0.0
          %v590 = vsel %vm566, %v582, 0.0
          %v591 = vsel %vm567, %v583, 0.0
          %v592 = vsel %vm568, %v584, 0.0
          %594 = vset.pattern.permute.xlu0 32
          %595 = vperm.xlu0 %594, %v585
          %v596 = vpop.permute.xlu0 %595
          %599 = vset.pattern.permute.xlu0 32
          %600 = vperm.xlu0 %599, %v586
          %v601 = vpop.permute.xlu0 %600
          %604 = vset.pattern.permute.xlu0 32
          %605 = vperm.xlu0 %604, %v587
          %v606 = vpop.permute.xlu0 %605
          %609 = vset.pattern.permute.xlu0 32
          %610 = vperm.xlu0 %609, %v588
          %v611 = vpop.permute.xlu0 %610
          %614 = vset.pattern.permute.xlu0 32
          %615 = vperm.xlu0 %614, %v589
          %v616 = vpop.permute.xlu0 %615
          %619 = vset.pattern.permute.xlu0 32
          %620 = vperm.xlu0 %619, %v590
          %v621 = vpop.permute.xlu0 %620
          %624 = vset.pattern.permute.xlu0 32
          %625 = vperm.xlu0 %624, %v591
          %v626 = vpop.permute.xlu0 %625
          %629 = vset.pattern.permute.xlu0 32
          %630 = vperm.xlu0 %629, %v592
          %v631 = vpop.permute.xlu0 %630
          %v633 = vmul.f32 %v553, %v596
          %v634 = vmul.f32 %v554, %v601
          %v635 = vmul.f32 %v555, %v606
          %v636 = vmul.f32 %v556, %v611
          %v637 = vmul.f32 %v557, %v616
          %v638 = vmul.f32 %v558, %v621
          %v639 = vmul.f32 %v559, %v626
          %v640 = vmul.f32 %v560, %v631
          %v641 = vpack.c.bf16 %v634, %v633
          %v642 = vpack.c.bf16 %v636, %v635
          %v643 = vpack.c.bf16 %v638, %v637
          %v644 = vpack.c.bf16 %v640, %v639
          %v645 = vld [vmem:[%s332] sm:$0xf]
          %v646 = vld [vmem:[%s332 + $0x4] sm:$0xf]
          %v647 = vld [vmem:[%s332 + $0x8] sm:$0xf]
          %v648 = vld [vmem:[%s332 + $0xc] sm:$0xf]
          %v649 = vld [vmem:[%s332 + $0x10] sm:$0xf]
          %v650 = vld [vmem:[%s332 + $0x14] sm:$0xf]
          %v651 = vld [vmem:[%s332 + $0x18] sm:$0xf]
          %v652 = vld [vmem:[%s332 + $0x1c] sm:$0xf]
          %v653 = vld [vmem:[#allocation9] sm:$0xf]
          %v654 = vld [vmem:[#allocation9 + $0x4] sm:$0xf]
          %v655 = vld [vmem:[#allocation9 + $0x8] sm:$0xf]
          %v656 = vld [vmem:[#allocation9 + $0xc] sm:$0xf]
          %v657 = vld [vmem:[#allocation9 + $0x10] sm:$0xf]
          %v658 = vld [vmem:[#allocation9 + $0x14] sm:$0xf]
          %v659 = vld [vmem:[#allocation9 + $0x18] sm:$0xf]
          %v660 = vld [vmem:[#allocation9 + $0x1c] sm:$0xf]
          %v661 = vld [vmem:[#allocation9 + $0x20] sm:$0xf]
          %v662 = vld [vmem:[#allocation9 + $0x24] sm:$0xf]
          %v663 = vld [vmem:[#allocation9 + $0x28] sm:$0xf]
          %v664 = vld [vmem:[#allocation9 + $0x2c] sm:$0xf]
          %v665 = vld [vmem:[#allocation9 + $0x30] sm:$0xf]
          %v666 = vld [vmem:[#allocation9 + $0x34] sm:$0xf]
          %v667 = vld [vmem:[#allocation9 + $0x38] sm:$0xf]
          %v668 = vld [vmem:[#allocation9 + $0x3c] sm:$0xf]
          %v669 = vld [vmem:[#allocation10] sm:$0xf]
          %v670 = vld [vmem:[#allocation10 + $0x4] sm:$0xf]
          %v671 = vld [vmem:[#allocation10 + $0x8] sm:$0xf]
          %v672 = vld [vmem:[#allocation10 + $0xc] sm:$0xf]
          %v673 = vld [vmem:[#allocation10 + $0x10] sm:$0xf]
          %v674 = vld [vmem:[#allocation10 + $0x14] sm:$0xf]
          %v675 = vld [vmem:[#allocation10 + $0x18] sm:$0xf]
          %v676 = vld [vmem:[#allocation10 + $0x1c] sm:$0xf]
          %v677 = vld [vmem:[#allocation10 + $0x20] sm:$0xf]
          %v678 = vld [vmem:[#allocation10 + $0x24] sm:$0xf]
          %v679 = vld [vmem:[#allocation10 + $0x28] sm:$0xf]
          %v680 = vld [vmem:[#allocation10 + $0x2c] sm:$0xf]
          %v681 = vld [vmem:[#allocation10 + $0x30] sm:$0xf]
          %v682 = vld [vmem:[#allocation10 + $0x34] sm:$0xf]
          %v683 = vld [vmem:[#allocation10 + $0x38] sm:$0xf]
          %v684 = vld [vmem:[#allocation10 + $0x3c] sm:$0xf]
          %v701 = vunpack.c.l.b16 %v669
          %v702 = vunpack.c.l.b16 %v670
          %v703 = vunpack.c.l.b16 %v671
          %v704 = vunpack.c.l.b16 %v672
          %v705 = vunpack.c.l.b16 %v673
          %v706 = vunpack.c.l.b16 %v674
          %v707 = vunpack.c.l.b16 %v675
          %v708 = vunpack.c.l.b16 %v676
          %v709 = vunpack.c.l.b16 %v677
          %v710 = vunpack.c.l.b16 %v678
          %v711 = vunpack.c.l.b16 %v679
          %v712 = vunpack.c.l.b16 %v680
          %v713 = vunpack.c.l.b16 %v681
          %v714 = vunpack.c.l.b16 %v682
          %v715 = vunpack.c.l.b16 %v683
          %v716 = vunpack.c.l.b16 %v684
          %v717 = vpack.c.b16 %v702, %v701
          %v718 = vpack.c.b16 %v704, %v703
          %v719 = vpack.c.b16 %v706, %v705
          %v720 = vpack.c.b16 %v708, %v707
          %v721 = vpack.c.b16 %v710, %v709
          %v722 = vpack.c.b16 %v712, %v711
          %v723 = vpack.c.b16 %v714, %v713
          %v724 = vpack.c.b16 %v716, %v715
          %733 = vmatprep.subr.bf16.mxu0 0
          %734 = vmatpush1.bf16.msra.mxu0 %v717
          %735 = vmatprep.subr.bf16.mxu0 0
          %736 = vmatpush1.bf16.msra.mxu0 %v718
          %737 = vmatprep.subr.bf16.mxu0 0
          %738 = vmatpush1.bf16.msra.mxu0 %v719
          %739 = vmatprep.subr.bf16.mxu0 0
          %740 = vmatpush1.bf16.msra.mxu0 %v720
          %741 = vmatprep.subr.bf16.mxu0 0
          %742 = vmatpush1.bf16.msra.mxu0 %v721
          %743 = vmatprep.subr.bf16.mxu0 0
          %744 = vmatpush1.bf16.msra.mxu0 %v722
          %745 = vmatprep.subr.bf16.mxu0 0
          %746 = vmatpush1.bf16.msra.mxu0 %v723
          %747 = vmatprep.subr.bf16.mxu0 0
          %748 = vmatpush1.bf16.msra.mxu0 %v724
          %749 = vmatprep.subr.bf16.mxu0 0
          %750 = vmatpush1.bf16.msra.mxu0 0
          %751 = vmatprep.subr.bf16.mxu0 0
          %752 = vmatpush1.bf16.msra.mxu0 0
          %753 = vmatprep.subr.bf16.mxu0 0
          %754 = vmatpush1.bf16.msra.mxu0 0
          %755 = vmatprep.subr.bf16.mxu0 0
          %756 = vmatpush1.bf16.msra.mxu0 0
          %757 = vmatprep.subr.bf16.mxu0 0
          %758 = vmatpush1.bf16.msra.mxu0 0
          %759 = vmatprep.subr.bf16.mxu0 0
          %760 = vmatpush1.bf16.msra.mxu0 0
          %761 = vmatprep.subr.bf16.mxu0 0
          %762 = vmatpush1.bf16.msra.mxu0 0
          %763 = vmatprep.subr.bf16.mxu0 0
          %764 = vmatpush1.bf16.msra.mxu0 0
          %765 = vmatprep.mubr.bf16.mxu0 0
          %766 = vmatmul.mubr.bf16.gmra.mrb[0].mxu0 %v641
          %v767 = vpop.f32.mrb[0].mxu0
          %v768 = vadd.f32 0.0, %v767
          %v769 = vpop.f32.mrb[0].mxu0
          %v770 = vpop.f32.mrb[0].mxu0
          %v771 = vadd.f32 0.0, %v770
          %v772 = vpop.f32.mrb[0].mxu0
          %773 = vmatprep.mubr.bf16.mxu0 0
          %774 = vmatmul.mubr.bf16.gmra.mrb[0].mxu0 %v642
          %v775 = vpop.f32.mrb[0].mxu0
          %v776 = vadd.f32 0.0, %v775
          %v777 = vpop.f32.mrb[0].mxu0
          %v778 = vpop.f32.mrb[0].mxu0
          %v779 = vadd.f32 0.0, %v778
          %v780 = vpop.f32.mrb[0].mxu0
          %781 = vmatprep.mubr.bf16.mxu0 0
          %782 = vmatmul.mubr.bf16.gmra.mrb[0].mxu0 %v643
          %v783 = vpop.f32.mrb[0].mxu0
          %v784 = vadd.f32 0.0, %v783
          %v785 = vpop.f32.mrb[0].mxu0
          %v786 = vpop.f32.mrb[0].mxu0
          %v787 = vadd.f32 0.0, %v786
          %v788 = vpop.f32.mrb[0].mxu0
          %789 = vmatprep.mubr.bf16.mxu0 0
          %790 = vmatmul.mubr.bf16.gmra.mrb[0].mxu0 %v644
          %v791 = vpop.f32.mrb[0].mxu0
          %v792 = vadd.f32 0.0, %v791
          %v793 = vpop.f32.mrb[0].mxu0
          %v794 = vpop.f32.mrb[0].mxu0
          %v795 = vadd.f32 0.0, %v794
          %v796 = vpop.f32.mrb[0].mxu0
          %797 = vdwg.mxu0
          %v806 = vunpack.c.l.b16 %v645
          %v807 = vunpack.c.l.b16 %v646
          %v808 = vunpack.c.l.b16 %v647
          %v809 = vunpack.c.l.b16 %v648
          %v810 = vunpack.c.l.b16 %v649
          %v811 = vunpack.c.l.b16 %v650
          %v812 = vunpack.c.l.b16 %v651
          %v813 = vunpack.c.l.b16 %v652
          %v814 = vpack.c.b16 %v807, %v806
          %v815 = vpack.c.b16 %v809, %v808
          %v816 = vpack.c.b16 %v811, %v810
          %v817 = vpack.c.b16 %v813, %v812
          %v838 = vunpack.c.l.b16 %v653
          %v839 = vunpack.c.l.b16 %v654
          %v840 = vunpack.c.l.b16 %v655
          %v841 = vunpack.c.l.b16 %v656
          %v842 = vunpack.c.l.b16 %v657
          %v843 = vunpack.c.l.b16 %v658
          %v844 = vunpack.c.l.b16 %v659
          %v845 = vunpack.c.l.b16 %v660
          %v846 = vunpack.c.l.b16 %v661
          %v847 = vunpack.c.l.b16 %v662
          %v848 = vunpack.c.l.b16 %v663
          %v849 = vunpack.c.l.b16 %v664
          %v850 = vunpack.c.l.b16 %v665
          %v851 = vunpack.c.l.b16 %v666
          %v852 = vunpack.c.l.b16 %v667
          %v853 = vunpack.c.l.b16 %v668
          %v854 = vpack.c.b16 %v839, %v838
          %v855 = vpack.c.b16 %v841, %v840
          %v856 = vpack.c.b16 %v843, %v842
          %v857 = vpack.c.b16 %v845, %v844
          %v858 = vpack.c.b16 %v847, %v846
          %v859 = vpack.c.b16 %v849, %v848
          %v860 = vpack.c.b16 %v851, %v850
          %v861 = vpack.c.b16 %v853, %v852
          %870 = vmatprep.subr.bf16.mxu0 0
          %871 = vmatpush1.bf16.msra.mxu0 %v854
          %872 = vmatprep.subr.bf16.mxu0 0
          %873 = vmatpush1.bf16.msra.mxu0 %v855
          %874 = vmatprep.subr.bf16.mxu0 0
          %875 = vmatpush1.bf16.msra.mxu0 %v856
          %876 = vmatprep.subr.bf16.mxu0 0
          %877 = vmatpush1.bf16.msra.mxu0 %v857
          %878 = vmatprep.subr.bf16.mxu0 0
          %879 = vmatpush1.bf16.msra.mxu0 %v858
          %880 = vmatprep.subr.bf16.mxu0 0
          %881 = vmatpush1.bf16.msra.mxu0 %v859
          %882 = vmatprep.subr.bf16.mxu0 0
          %883 = vmatpush1.bf16.msra.mxu0 %v860
          %884 = vmatprep.subr.bf16.mxu0 0
          %885 = vmatpush1.bf16.msra.mxu0 %v861
          %886 = vmatprep.subr.bf16.mxu0 0
          %887 = vmatpush1.bf16.msra.mxu0 0
          %888 = vmatprep.subr.bf16.mxu0 0
          %889 = vmatpush1.bf16.msra.mxu0 0
          %890 = vmatprep.subr.bf16.mxu0 0
          %891 = vmatpush1.bf16.msra.mxu0 0
          %892 = vmatprep.subr.bf16.mxu0 0
          %893 = vmatpush1.bf16.msra.mxu0 0
          %894 = vmatprep.subr.bf16.mxu0 0
          %895 = vmatpush1.bf16.msra.mxu0 0
          %896 = vmatprep.subr.bf16.mxu0 0
          %897 = vmatpush1.bf16.msra.mxu0 0
          %898 = vmatprep.subr.bf16.mxu0 0
          %899 = vmatpush1.bf16.msra.mxu0 0
          %900 = vmatprep.subr.bf16.mxu0 0
          %901 = vmatpush1.bf16.msra.mxu0 0
          %902 = vmatprep.mubr.bf16.mxu0 0
          %903 = vmatmul.mubr.bf16.gmra.mrb[0].mxu0 %v814
          %v904 = vpop.f32.mrb[0].mxu0
          %v905 = vadd.f32 %v768, %v904
          %v906 = vpop.f32.mrb[0].mxu0
          %v907 = vpop.f32.mrb[0].mxu0
          %v908 = vadd.f32 %v771, %v907
          %v909 = vpop.f32.mrb[0].mxu0
          %910 = vmatprep.mubr.bf16.mxu0 0
          %911 = vmatmul.mubr.bf16.gmra.mrb[0].mxu0 %v815
          %v912 = vpop.f32.mrb[0].mxu0
          %v913 = vadd.f32 %v776, %v912
          %v914 = vpop.f32.mrb[0].mxu0
          %v915 = vpop.f32.mrb[0].mxu0
          %v916 = vadd.f32 %v779, %v915
          %v917 = vpop.f32.mrb[0].mxu0
          %918 = vmatprep.mubr.bf16.mxu0 0
          %919 = vmatmul.mubr.bf16.gmra.mrb[0].mxu0 %v816
          %v920 = vpop.f32.mrb[0].mxu0
          %v921 = vadd.f32 %v784, %v920
          %v922 = vpop.f32.mrb[0].mxu0
          %v923 = vpop.f32.mrb[0].mxu0
          %v924 = vadd.f32 %v787, %v923
          %v925 = vpop.f32.mrb[0].mxu0
          %926 = vmatprep.mubr.bf16.mxu0 0
          %927 = vmatmul.mubr.bf16.gmra.mrb[0].mxu0 %v817
          %v928 = vpop.f32.mrb[0].mxu0
          %v929 = vadd.f32 %v792, %v928
          %v930 = vpop.f32.mrb[0].mxu0
          %v931 = vpop.f32.mrb[0].mxu0
          %v932 = vadd.f32 %v795, %v931
          %v933 = vpop.f32.mrb[0].mxu0
          %934 = vdwg.mxu0
          %v935 = vld [vmem:[%s5] sm:$0x1]
          %v937 = vlaneseq
          %v938 = vshrl.u32 %v937, 7
          %v939 = vsub.s32 0, %v938
          %v940 = vrot.slane %v935, %v939
          %v942 = vadd.f32 %v905, %v940
          %v943 = vadd.f32 %v908, %v940
          %v944 = vadd.f32 %v913, %v940
          %v945 = vadd.f32 %v916, %v940
          %v946 = vadd.f32 %v921, %v940
          %v947 = vadd.f32 %v924, %v940
          %v948 = vadd.f32 %v929, %v940
          %v949 = vadd.f32 %v932, %v940
          %v950 = vmax.f32 %v942, 0.0
          %v951 = vmax.f32 %v943, 0.0
          %v952 = vmax.f32 %v944, 0.0
          %v953 = vmax.f32 %v945, 0.0
          %v954 = vmax.f32 %v946, 0.0
          %v955 = vmax.f32 %v947, 0.0
          %v956 = vmax.f32 %v948, 0.0
          %v957 = vmax.f32 %v949, 0.0
          %958 = vst [vmem:[%s373] sm:$0xff] %v950
          %959 = vst [vmem:[%s373 + $0x8] sm:$0xff] %v951
          %960 = vst [vmem:[%s373 + $0x10] sm:$0xff] %v952
          %961 = vst [vmem:[%s373 + $0x18] sm:$0xff] %v953
          %962 = vst [vmem:[%s373 + $0x20] sm:$0xff] %v954
          %963 = vst [vmem:[%s373 + $0x28] sm:$0xff] %v955
          %964 = vst [vmem:[%s373 + $0x30] sm:$0xff] %v956
          %965 = vst [vmem:[%s373 + $0x38] sm:$0xff] %v957
        $region72: #{tpu_custom_call.1} parent=43 // pred_fallthru
          _
        %s966 = sand.u32 %s188, 1
        %s967 = scalar_lea.sflag [#allocation5], %s966
        %s968 = sand.u32 %s188, 1
        %s969 = smul.addr %s968, 64
        %s970 = scalar_lea.vmem [#allocation12], %s969
        // Predicated region
        $region73: #{tpu_custom_call.1} parent=43 // pred_check
          %p971 = pneg %p198
        $region74: #{tpu_custom_call.1} parent=43 // pred_check_branch
          %973 = sbr.rel (%p971) target = $region76
        $region75: #{tpu_custom_call.1} parent=43 // pred_region
          %s974 = smul.u32 8, %s29
          %s976 = ssub.s32 1024, 1024
          %977 = vsyncadd %s967, %s976
          %s978 = smul.addr %s974, 128
          %s979 = scalar_lea.hbm %s6, %s978
          %s980 = sshll.u32 %s970, 4
          %s981 = int_to_ptr.vmem [resolvable:$true] %s980
          %986 = dma.vmem_to_hbm [thread:$0]  %s981, 1024, %s979, %s967, 128, 128, 8
        $region76: #{tpu_custom_call.1} parent=43 // pred_fallthru
          _
      $region44: #{tpu_custom_call.1} parent=5 // pred_fallthru
        _
      %p987 = scmp.le.s32.totalorder 2, %s20
      // Predicated region
      $region77: #{tpu_custom_call.1} parent=5 // pred_check
        %p988 = pneg %p987
      $region78: #{tpu_custom_call.1} parent=5 // pred_check_branch
        %990 = sbr.rel (%p988) target = $region80
      $region79: #{tpu_custom_call.1} parent=5 // pred_region
        %s991 = ssub.s32 %s20, 2
        // Predicated region
        $region81: #{tpu_custom_call.1} parent=79 // pred_check
          %p992 = pneg %p204
        $region82: #{tpu_custom_call.1} parent=79 // pred_check_branch
          %994 = sbr.rel (%p992) target = $region84
        $region83: #{tpu_custom_call.1} parent=79 // pred_region
          %s995 = sand.u32 %s189, 1
          %s996 = scalar_lea.sflag [#allocation5], %s995
          %s997 = sand.u32 %s189, 1
          %s998 = smul.addr %s997, 64
          %s999 = scalar_lea.vmem [#allocation12], %s998
          %1000 = dma.done %s996, 1024
        $region84: #{tpu_custom_call.1} parent=79 // pred_fallthru
          _
      $region80: #{tpu_custom_call.1} parent=5 // pred_fallthru
        _
    $region6: #{tpu_custom_call.1} parent=1 // loop_footer
      %s24 = sadd.s32 1, %s20
    $region7: #{tpu_custom_call.1} parent=1 // loop_footer_branch
      %19 = sbr.rel target = $region3
    $region8: #{tpu_custom_call.1} parent=1 // loop_exit
      _
    %1001 = vsyncpa [#allocation4], 1
    %s1002 = scalar_lea.sflag [#allocation4], 1
    %1003 = vsyncpa %s1002, 1
    %1004 = vsyncpa [#allocation7], 1
    %1005 = vsyncpa [#allocation11], 1
    %1006 = vsyncpa [#allocation5], 1
    %s1007 = scalar_lea.sflag [#allocation5], 1
    %1008 = vsyncpa %s1007, 1

</llo_original>
